<compile_context>
chip_gen: v6e
topology: v6e:2x2x1
jax: 0.10.0
libtpu: 0.0.40
codegen_flags: <defaults>
</compile_context>

<pallas_src>
import functools

import jax
import jax.numpy as jnp
from jax.experimental import pallas as pl
from jax.experimental.pallas import tpu as pltpu

LEAKAGE = 0.1            # kwargs.get('leakage', 0.1); 0 < LEAKAGE < 1
MASK_BIAS = -1e30        # additive mask value (same effect as masked_fill(min))
C1 = 0.5 * (1.0 + LEAKAGE)   # LeakyReLU(x) = C1*x + C2*|x|
C2 = 0.5 * (1.0 - LEAKAGE)
A_GROUP = 4              # head-dim terms fused per score-accumulator update


def _pick_tile(dim, preferred):
    """Largest of {preferred, 512, 256, 128} dividing `dim`, else the full dim.
    # TODO(synk): large dims not divisible by any candidate fall back to one
    # full-size block; padded+masked tiles would be needed for those shapes."""
    for cand in (preferred, 512, 256, 128):
        if cand <= dim and dim % cand == 0:
            return cand
    return dim


def _vmem_limit(est_bytes):
    """Generation-aware scoped-VMEM limit (v7x only has 64 MiB physical VMEM)."""
    try:
        cap = int(0.75 * pltpu.get_tpu_info().vmem_capacity_bytes)
    except Exception:
        cap = 48 * 2**20          # safe on v5e/v6e (128 MiB) and v7x (64 MiB)
    return int(min(cap, max(32 * 2**20, 4 * est_bytes)))


# ----------------------------------------------------------------------------
# Tiled projection matmul: bf16 MXU operands, f32 accumulation in VMEM scratch.
# ----------------------------------------------------------------------------
def _matmul_kernel(x_ref, w_ref, o_ref, acc_ref):
    @pl.when(pl.program_id(2) == 0)
    def _():
        acc_ref[...] = jnp.zeros(acc_ref.shape, acc_ref.dtype)

    # astype is a no-op here: activations and weights arrive already in bf16.
    acc_ref[...] += jnp.dot(
        x_ref[...].astype(jnp.bfloat16),
        w_ref[...].astype(jnp.bfloat16),
        preferred_element_type=jnp.float32,
    )

    @pl.when(pl.program_id(2) == pl.num_programs(2) - 1)
    def _():
        o_ref[...] = acc_ref[...].astype(o_ref.dtype)


def pallas_matmul(x, w, *, out_dtype=jnp.float32):
    """x: (M, K), w: (K, N) -> (M, N). Weights are expected pre-transposed."""
    M, K = x.shape
    K2, N = w.shape
    assert K == K2
    tm = _pick_tile(M, 256)
    tn = _pick_tile(N, 256)
    tk = _pick_tile(K, 512)
    # Conservative (4 B/elem) estimate: double-buffered in/out blocks + f32 acc.
    est = 2 * 4 * (tm * tk + tk * tn + tm * tn) + 4 * tm * tn
    return pl.pallas_call(
        _matmul_kernel,
        out_shape=jax.ShapeDtypeStruct((M, N), out_dtype),
        grid=(M // tm, N // tn, K // tk),
        in_specs=[
            pl.BlockSpec((tm, tk), lambda i, j, k: (i, k)),
            pl.BlockSpec((tk, tn), lambda i, j, k: (k, j)),
        ],
        out_specs=pl.BlockSpec((tm, tn), lambda i, j, k: (i, j)),
        scratch_shapes=[pltpu.VMEM((tm, tn), jnp.float32)],
        compiler_params=pltpu.CompilerParams(
            dimension_semantics=("parallel", "parallel", "arbitrary"),
            vmem_limit_bytes=_vmem_limit(est),
        ),
    )(x, w)


# ----------------------------------------------------------------------------
# GATv3 attention: flash-style over the softmax (j) axis, all heads per step.
# ----------------------------------------------------------------------------
def _gat_attn_kernel(w_ref, wsel_ref, wselt_ref,
                     k_ref, qt_ref, v_ref, mask_ref, o_ref,
                     acc_ref, m_ref, l_ref, *, H, A):
    # w_ref    : (A,)     attn_map weights in SMEM (scalar reads)
    # wsel_ref : (E, H)   w-weighted head selector (for the separable C1 term)
    # wselt_ref: (H, E)   its transpose (pre-built in the wrapper)
    # k_ref    : (ti, E)  K rows, output positions i (bf16)
    # qt_ref   : (E, tj)  Q pre-transposed, reduction positions j (bf16)
    # v_ref    : (tj, E)  V rows, reduction positions j (bf16)
    # mask_ref : (ti, tj) int8 mask (1 = masked out)
    # o_ref    : (ti, E)  bf16, written once at the last j step
    # acc/m/l  : VMEM scratch carried across the innermost (j) grid axis
    j_idx = pl.program_id(2)
    ti = acc_ref.shape[0]

    @pl.when(j_idx == 0)
    def _():
        m_ref[...] = jnp.full(m_ref.shape, -jnp.inf, m_ref.dtype)
        l_ref[...] = jnp.zeros(l_ref.shape, l_ref.dtype)
        acc_ref[...] = jnp.zeros(acc_ref.shape, acc_ref.dtype)

    # Per-step tiles, cast once and shared by all heads.
    k_f = k_ref[...].astype(jnp.float32)                     # (ti, E)
    qt_f = qt_ref[...].astype(jnp.float32)                   # (E, tj)
    v_t = v_ref[...]                                         # (tj, E) bf16
    # Additive mask bias built in-kernel (amortized over H heads): 0 or -1e30.
    bias = mask_ref[...].astype(jnp.float32) * jnp.float32(MASK_BIAS)   # (ti, tj)

    # Separable LeakyReLU part for all heads at once (tiny MXU matmuls):
    #   kw[i,h] = sum_a w[a]*k[i,h*A+a],  qw[h,j] = sum_a w[a]*q[j,h*A+a]
    kw = jnp.dot(k_f, wsel_ref[...], preferred_element_type=jnp.float32)    # (ti, H)
    qw = jnp.dot(wselt_ref[...], qt_f, preferred_element_type=jnp.float32)  # (H, tj)

    # attn_map scalars (SMEM), hoisted out of the head/dim loops.
    c2w = [C2 * w_ref[a] for a in range(A)]

    m_prev = m_ref[...]                                      # (ti, H)
    l_prev = l_ref[...]

    m_cols, l_cols, alpha_cols, pv_cols = [], [], [], []
    for h in range(H):
        base = h * A

        # s[i,j] = bias + C1*(kw[i,h]+qw[h,j]) + C2*sum_a w[a]*|k[i,a]+q[j,a]|
        s = bias + C1 * (kw[:, h:h + 1] + qw[h:h + 1, :])
        for g0 in range(0, A, A_GROUP):
            part = None
            for a in range(g0, min(g0 + A_GROUP, A)):
                pair = k_f[:, base + a:base + a + 1] + qt_f[base + a:base + a + 1, :]
                term = c2w[a] * jnp.abs(pair)
                part = term if part is None else part + term
            s = s + part          # one accumulator update per A_GROUP terms

        # Online softmax (over j) for head h.
        mp = m_prev[:, h:h + 1]
        lp = l_prev[:, h:h + 1]
        m_new = jnp.maximum(mp, jnp.max(s, axis=-1, keepdims=True))
        alpha = jnp.exp(mp - m_new)
        p = jnp.exp(s - m_new)                               # (ti, tj)
        l_new = alpha * lp + jnp.sum(p, axis=-1, keepdims=True)

        pv = jnp.dot(p.astype(jnp.bfloat16), v_t[:, base:base + A],
                     preferred_element_type=jnp.float32)     # (ti, A) on MXU

        m_cols.append(m_new)
        l_cols.append(l_new)
        alpha_cols.append(alpha)
        pv_cols.append(pv)

    # Batch all per-head updates into full-width writes (no masked width-A
    # read-modify-writes of acc / m / l).
    m_ref[...] = jnp.concatenate(m_cols, axis=-1)            # (ti, H)
    l_ref[...] = jnp.concatenate(l_cols, axis=-1)            # (ti, H)
    alpha_full = jnp.concatenate(
        [jnp.broadcast_to(a, (ti, A)) for a in alpha_cols], axis=-1)   # (ti, E)
    pv_all = jnp.concatenate(pv_cols, axis=-1)                         # (ti, E)
    acc_ref[...] = alpha_full * acc_ref[...] + pv_all

    @pl.when(j_idx == pl.num_programs(2) - 1)
    def _():
        inv_l = pl.reciprocal(l_ref[...], approx=True)       # (ti, H), EUP slot
        inv_full = jnp.concatenate(
            [jnp.broadcast_to(inv_l[:, h:h + 1], (ti, A)) for h in range(H)],
            axis=-1)                                         # (ti, E)
        # Single lane-dense store of the whole output block.
        o_ref[...] = (acc_ref[...] * inv_full).astype(o_ref.dtype)


def gat_attention(w_attn, w_sel, w_sel_t, k, qT, v, mask_i8, *, H, A):
    """k,v: (B,L,E) bf16 head-major; qT: (B,E,L) bf16; mask: (B,L,L) int8."""
    B, L, E = k.shape
    assert E == H * A and qT.shape == (B, E, L) and mask_i8.shape == (B, L, L)

    # 128-preferred tiles: lower vreg pressure in the VALU-bound score loop and
    # better megacore occupancy on v7x (B*(L/ti) blocks over the parallel axes).
    ti = _pick_tile(L, 128)
    tj = _pick_tile(L, 128)

    est = (2 * 2 * (ti * E + E * tj + tj * E + ti * E)   # dbl-buffered bf16 blocks
           + 2 * ti * tj                                  # int8 mask blocks
           + 4 * ti * E + 8 * ti * H                      # persistent scratch
           + 12 * 4 * ti * tj + 8 * 4 * ti * E)           # score/softmax temps

    kernel = functools.partial(_gat_attn_kernel, H=H, A=A)
    return pl.pallas_call(
        kernel,
        out_shape=jax.ShapeDtypeStruct((B, L, E), jnp.bfloat16),
        grid=(B, L // ti, L // tj),
        in_specs=[
            # attn_map weight: tiny, lives in SMEM, read as scalars.
            pl.BlockSpec(memory_space=pltpu.MemorySpace.SMEM),
            # Tiny constants, fetched once (block index never changes).
            pl.BlockSpec((E, H), lambda b, i, j: (0, 0)),
            pl.BlockSpec((H, E), lambda b, i, j: (0, 0)),
            # K rows: output positions i.
            pl.BlockSpec((None, ti, E), lambda b, i, j: (b, i, 0)),
            # Q pre-transposed: reduction positions j along lanes (no XLU xpose).
            pl.BlockSpec((None, E, tj), lambda b, i, j: (b, 0, j)),
            # V rows: reduction positions j.
            pl.BlockSpec((None, tj, E), lambda b, i, j: (b, j, 0)),
            # int8 mask: head-independent -> fetched once per step.
            pl.BlockSpec((None, ti, tj), lambda b, i, j: (b, i, j)),
        ],
        # Same block for every j -> stays VMEM-resident across the kv axis.
        out_specs=pl.BlockSpec((None, ti, E), lambda b, i, j: (b, i, 0)),
        scratch_shapes=[
            pltpu.VMEM((ti, E), jnp.float32),   # value accumulator (all heads)
            pltpu.VMEM((ti, H), jnp.float32),   # running max per head
            pltpu.VMEM((ti, H), jnp.float32),   # running sum per head
        ],
        compiler_params=pltpu.CompilerParams(
            dimension_semantics=("parallel", "parallel", "arbitrary"),
            vmem_limit_bytes=_vmem_limit(est),
        ),
    )(w_attn, w_sel, w_sel_t, k, qT, v, mask_i8)


# ----------------------------------------------------------------------------
# Forward glue
# ----------------------------------------------------------------------------
def prepare_params(W_qkv, W_attn, W_out):
    """One-time weight prep: fold nn.Linear transposes, pre-cast GEMM weights to
    bf16, and build the tiny w-weighted head-selector used for the separable
    LeakyReLU term inside the attention kernel."""
    threeE, E = W_qkv.shape
    A = W_attn.shape[-1]
    H = E // A
    w = jnp.asarray(W_attn.reshape(-1), dtype=jnp.float32)            # (A,)
    sel = (jnp.arange(E)[:, None] // A) == jnp.arange(H)[None, :]     # (E, H)
    w_sel = sel.astype(jnp.float32) * jnp.tile(w, H)[:, None]         # (E, H)
    return {
        "W_qkv_t": jnp.asarray(W_qkv.T, dtype=jnp.bfloat16),          # (E, 3E)
        "W_out_t": jnp.asarray(W_out.T, dtype=jnp.bfloat16),          # (E, E)
        "w_attn": w,
        "w_sel": w_sel,
        "w_sel_t": w_sel.T,                                           # (H, E)
    }


@jax.jit
def gatv3_forward(embeddings, attn_mask, params):
    B, L, E = embeddings.shape
    A = params["w_attn"].shape[0]
    H = E // A

    # Fused QKV projection; bf16 activations in and out (halves HBM traffic).
    x_bf16 = embeddings.astype(jnp.bfloat16)
    qkv = pallas_matmul(x_bf16.reshape(B * L, E), params["W_qkv_t"],
                        out_dtype=jnp.bfloat16)                        # (B*L, 3E)
    qkv = qkv.reshape(B, L, H, 3 * A)
    k = qkv[..., A:2 * A].reshape(B, L, E)                             # head-major K
    v = qkv[..., 2 * A:].reshape(B, L, E)                              # head-major V
    # Q pre-transposed to (B, E, L): the kernel reads lane-dense q rows directly.
    qT = qkv[..., :A].transpose(0, 2, 3, 1).reshape(B, E, L)

    # Mask stays 1 byte/elem; the additive bias is built in-kernel per step.
    mask_i8 = attn_mask.reshape(B, L, L).astype(jnp.int8)

    vals = gat_attention(params["w_attn"], params["w_sel"], params["w_sel_t"],
                         k, qT, v, mask_i8, H=H, A=A)                  # (B,L,E) bf16

    out = pallas_matmul(vals.reshape(B * L, E), params["W_out_t"],
                        out_dtype=jnp.float32)                         # out_map
    return out.reshape(B, L, E)


# ----------------------------------------------------------------------------
# Pure-JAX f32 reference (mirrors the PyTorch module exactly)
# ----------------------------------------------------------------------------
def gatv3_reference(embeddings, attn_mask, raw_params, H):
    B, L, E = embeddings.shape
    A = E // H
    W_qkv, W_attn, W_out = raw_params
    qkv = embeddings @ W_qkv.T
    qkv = qkv.reshape(B, L, H, 3 * A).transpose(0, 2, 1, 3)
    q, k, v = qkv[..., :A], qkv[..., A:2 * A], qkv[..., 2 * A:]
    attn = q[:, :, None, :, :] + k[:, :, :, None, :]                   # (B,H,L,L,A)
    attn = jnp.where(attn >= 0, attn, LEAKAGE * attn)
    attn = jnp.einsum("bhija,a->bhij", attn, W_attn[0])
    attn = jnp.where(attn_mask, jnp.finfo(jnp.float32).min, attn)
    attn = jax.nn.softmax(attn, axis=-1)
    vals = attn @ v
    vals = vals.transpose(0, 2, 1, 3).reshape(B, L, E)
    return vals @ W_out.T


if __name__ == "__main__":
    B, L, E, H = 2, 8, 32, 4
    A = E // H

    key = jax.random.PRNGKey(0)
    k_emb, k_mask, k_qkv, k_attn, k_out = jax.random.split(key, 5)

    embeddings = jax.random.normal(k_emb, (B, L, E), dtype=jnp.float32)
    attn_mask = jax.random.bernoulli(k_mask, 0.25, (B, 1, L, L))       # bool

    # nn.Linear weight layouts
    W_qkv = 0.1 * jax.random.normal(k_qkv, (3 * E, E), dtype=jnp.float32)
    W_attn = 0.1 * jax.random.normal(k_attn, (1, A), dtype=jnp.float32)
    W_out = 0.1 * jax.random.normal(k_out, (E, E), dtype=jnp.float32)

    params = prepare_params(W_qkv, W_attn, W_out)

    out = gatv3_forward(embeddings, attn_mask, params)
    out = jax.block_until_ready(out)

    ref = gatv3_reference(embeddings, attn_mask, (W_qkv, W_attn, W_out), H)
    assert out.shape == (B, L, E)
    err = jnp.max(jnp.abs(out - ref))
    assert jnp.allclose(out, ref, atol=2e-2, rtol=2e-2), f"max abs err {err}"
    print("KERNEL_OK")
</pallas_src>

<mosaic_0001>
module attributes {stable_mosaic.version = 11 : i64} {
  func.func @_matmul_kernel(%arg0: i32, %arg1: i32, %arg2: i32, %arg3: memref<16x32xbf16, #tpu.memory_space<vmem>>, %arg4: memref<32x96xbf16, #tpu.memory_space<vmem>>, %arg5: memref<16x96xbf16, #tpu.memory_space<vmem>>, %arg6: memref<16x96xf32, #tpu.memory_space<vmem>>) attributes {dimension_semantics = [#tpu.dimension_semantics<parallel>, #tpu.dimension_semantics<parallel>, #tpu.dimension_semantics<arbitrary>], iteration_bounds = array<i64: 1, 1, 1>, scalar_prefetch = 0 : i64, scratch_operands = 1 : i64, tpu.core_type = #tpu.core_type<tc>, window_params = [{transform_indices = @transform_0, window_bounds = array<i64: 16, 32>}, {transform_indices = @transform_1, window_bounds = array<i64: 32, 96>}, {transform_indices = @transform_2, window_bounds = array<i64: 16, 96>}]} {
    %c0_i32 = arith.constant 0 : i32
    %0 = arith.cmpi eq, %arg2, %c0_i32 : i32
    %1 = arith.extui %0 : i1 to i32
    %c0_i32_0 = arith.constant 0 : i32
    %2 = arith.cmpi ne, %1, %c0_i32_0 : i32
    scf.if %2 {
      %cst_10 = arith.constant 0.000000e+00 : f32
      %12 = vector.broadcast %cst_10 : f32 to vector<16x96xf32>
      %c0_11 = arith.constant 0 : index
      %c0_12 = arith.constant 0 : index
      %13 = vector.load %arg6[%c0_11, %c0_12] : memref<16x96xf32, #tpu.memory_space<vmem>>, vector<16x96xf32>
      tpu.vector_store %arg6[%c0_11, %c0_12], %12 {strides = array<i32>} : memref<16x96xf32, #tpu.memory_space<vmem>>, vector<16x96xf32>,
    } else {
    }
    %c0 = arith.constant 0 : index
    %c0_1 = arith.constant 0 : index
    %3 = vector.load %arg6[%c0, %c0_1] : memref<16x96xf32, #tpu.memory_space<vmem>>, vector<16x96xf32>
    %c0_2 = arith.constant 0 : index
    %c0_3 = arith.constant 0 : index
    %4 = vector.load %arg3[%c0_2, %c0_3] : memref<16x32xbf16, #tpu.memory_space<vmem>>, vector<16x32xbf16>
    %c0_4 = arith.constant 0 : index
    %c0_5 = arith.constant 0 : index
    %5 = vector.load %arg4[%c0_4, %c0_5] : memref<32x96xbf16, #tpu.memory_space<vmem>>, vector<32x96xbf16>
    %cst = arith.constant dense<0.000000e+00> : vector<16x96xf32>
    %6 = tpu.matmul %4, %5, %cst {dimension_numbers = #tpu.dot_dimension_numbers<[1], [0], [0], [1], [0, 0, 1, 1], [], []>} : vector<16x32xbf16>, vector<32x96xbf16>, vector<16x96xf32> -> vector<16x96xf32>
    %7 = arith.addf %3, %6 : vector<16x96xf32>
    %c0_6 = arith.constant 0 : index
    %c0_7 = arith.constant 0 : index
    %8 = vector.load %arg6[%c0_6, %c0_7] : memref<16x96xf32, #tpu.memory_space<vmem>>, vector<16x96xf32>
    tpu.vector_store %arg6[%c0_6, %c0_7], %7 {strides = array<i32>} : memref<16x96xf32, #tpu.memory_space<vmem>>, vector<16x96xf32>,
    %c0_i32_8 = arith.constant 0 : i32
    %9 = arith.cmpi eq, %arg2, %c0_i32_8 : i32
    %10 = arith.extui %9 : i1 to i32
    %c0_i32_9 = arith.constant 0 : i32
    %11 = arith.cmpi ne, %10, %c0_i32_9 : i32
    scf.if %11 {
      %c0_10 = arith.constant 0 : index
      %c0_11 = arith.constant 0 : index
      %12 = vector.load %arg6[%c0_10, %c0_11] : memref<16x96xf32, #tpu.memory_space<vmem>>, vector<16x96xf32>
      %13 = arith.truncf %12 : vector<16x96xf32> to vector<16x96xbf16>
      %c0_12 = arith.constant 0 : index
      %c0_13 = arith.constant 0 : index
      %14 = vector.load %arg5[%c0_12, %c0_13] : memref<16x96xbf16, #tpu.memory_space<vmem>>, vector<16x96xbf16>
      tpu.vector_store %arg5[%c0_12, %c0_13], %13 {strides = array<i32>} : memref<16x96xbf16, #tpu.memory_space<vmem>>, vector<16x96xbf16>,
    } else {
    }
    return
  }
  func.func @transform_0(%arg0: i32, %arg1: i32, %arg2: i32) -> (i32, i32) {
    %c0_i32 = arith.constant 0 : i32
    return %arg0, %arg2 : i32, i32
  }
  func.func @transform_1(%arg0: i32, %arg1: i32, %arg2: i32) -> (i32, i32) {
    %c0_i32 = arith.constant 0 : i32
    return %arg2, %arg1 : i32, i32
  }
  func.func @transform_2(%arg0: i32, %arg1: i32, %arg2: i32) -> (i32, i32) {
    %c0_i32 = arith.constant 0 : i32
    return %arg0, %arg1 : i32, i32
  }
}

module attributes {stable_mosaic.version = 11 : i64} {
  func.func @_matmul_kernel(%arg0: i32, %arg1: i32, %arg2: i32, %arg3: memref<16x32xbf16, #tpu.memory_space<vmem>>, %arg4: memref<32x32xbf16, #tpu.memory_space<vmem>>, %arg5: memref<16x32xf32, #tpu.memory_space<vmem>>, %arg6: memref<16x32xf32, #tpu.memory_space<vmem>>) attributes {dimension_semantics = [#tpu.dimension_semantics<parallel>, #tpu.dimension_semantics<parallel>, #tpu.dimension_semantics<arbitrary>], iteration_bounds = array<i64: 1, 1, 1>, scalar_prefetch = 0 : i64, scratch_operands = 1 : i64, tpu.core_type = #tpu.core_type<tc>, window_params = [{transform_indices = @transform_0, window_bounds = array<i64: 16, 32>}, {transform_indices = @transform_1, window_bounds = array<i64: 32, 32>}, {transform_indices = @transform_2, window_bounds = array<i64: 16, 32>}]} {
    %c0_i32 = arith.constant 0 : i32
    %0 = arith.cmpi eq, %arg2, %c0_i32 : i32
    %1 = arith.extui %0 : i1 to i32
    %c0_i32_0 = arith.constant 0 : i32
    %2 = arith.cmpi ne, %1, %c0_i32_0 : i32
    scf.if %2 {
      %cst_10 = arith.constant 0.000000e+00 : f32
      %12 = vector.broadcast %cst_10 : f32 to vector<16x32xf32>
      %c0_11 = arith.constant 0 : index
      %c0_12 = arith.constant 0 : index
      %13 = vector.load %arg6[%c0_11, %c0_12] : memref<16x32xf32, #tpu.memory_space<vmem>>, vector<16x32xf32>
      tpu.vector_store %arg6[%c0_11, %c0_12], %12 {strides = array<i32>} : memref<16x32xf32, #tpu.memory_space<vmem>>, vector<16x32xf32>,
    } else {
    }
    %c0 = arith.constant 0 : index
    %c0_1 = arith.constant 0 : index
    %3 = vector.load %arg6[%c0, %c0_1] : memref<16x32xf32, #tpu.memory_space<vmem>>, vector<16x32xf32>
    %c0_2 = arith.constant 0 : index
    %c0_3 = arith.constant 0 : index
    %4 = vector.load %arg3[%c0_2, %c0_3] : memref<16x32xbf16, #tpu.memory_space<vmem>>, vector<16x32xbf16>
    %c0_4 = arith.constant 0 : index
    %c0_5 = arith.constant 0 : index
    %5 = vector.load %arg4[%c0_4, %c0_5] : memref<32x32xbf16, #tpu.memory_space<vmem>>, vector<32x32xbf16>
    %cst = arith.constant dense<0.000000e+00> : vector<16x32xf32>
    %6 = tpu.matmul %4, %5, %cst {dimension_numbers = #tpu.dot_dimension_numbers<[1], [0], [0], [1], [0, 0, 1, 1], [], []>} : vector<16x32xbf16>, vector<32x32xbf16>, vector<16x32xf32> -> vector<16x32xf32>
    %7 = arith.addf %3, %6 : vector<16x32xf32>
    %c0_6 = arith.constant 0 : index
    %c0_7 = arith.constant 0 : index
    %8 = vector.load %arg6[%c0_6, %c0_7] : memref<16x32xf32, #tpu.memory_space<vmem>>, vector<16x32xf32>
    tpu.vector_store %arg6[%c0_6, %c0_7], %7 {strides = array<i32>} : memref<16x32xf32, #tpu.memory_space<vmem>>, vector<16x32xf32>,
    %c0_i32_8 = arith.constant 0 : i32
    %9 = arith.cmpi eq, %arg2, %c0_i32_8 : i32
    %10 = arith.extui %9 : i1 to i32
    %c0_i32_9 = arith.constant 0 : i32
    %11 = arith.cmpi ne, %10, %c0_i32_9 : i32
    scf.if %11 {
      %c0_10 = arith.constant 0 : index
      %c0_11 = arith.constant 0 : index
      %12 = vector.load %arg6[%c0_10, %c0_11] : memref<16x32xf32, #tpu.memory_space<vmem>>, vector<16x32xf32>
      %c0_12 = arith.constant 0 : index
      %c0_13 = arith.constant 0 : index
      %13 = vector.load %arg5[%c0_12, %c0_13] : memref<16x32xf32, #tpu.memory_space<vmem>>, vector<16x32xf32>
      tpu.vector_store %arg5[%c0_12, %c0_13], %12 {strides = array<i32>} : memref<16x32xf32, #tpu.memory_space<vmem>>, vector<16x32xf32>,
    } else {
    }
    return
  }
  func.func @transform_0(%arg0: i32, %arg1: i32, %arg2: i32) -> (i32, i32) {
    %c0_i32 = arith.constant 0 : i32
    return %arg0, %arg2 : i32, i32
  }
  func.func @transform_1(%arg0: i32, %arg1: i32, %arg2: i32) -> (i32, i32) {
    %c0_i32 = arith.constant 0 : i32
    return %arg2, %arg1 : i32, i32
  }
  func.func @transform_2(%arg0: i32, %arg1: i32, %arg2: i32) -> (i32, i32) {
    %c0_i32 = arith.constant 0 : i32
    return %arg0, %arg1 : i32, i32
  }
}

module attributes {stable_mosaic.version = 11 : i64} {
  func.func @_gat_attn_kernel(%arg0: i32, %arg1: i32, %arg2: i32, %arg3: memref<8xf32, #tpu.memory_space<smem>>, %arg4: memref<32x4xf32, #tpu.memory_space<vmem>>, %arg5: memref<4x32xf32, #tpu.memory_space<vmem>>, %arg6: memref<1x8x32xbf16, #tpu.memory_space<vmem>>, %arg7: memref<1x32x8xbf16, #tpu.memory_space<vmem>>, %arg8: memref<1x8x32xbf16, #tpu.memory_space<vmem>>, %arg9: memref<1x8x8xi8, #tpu.memory_space<vmem>>, %arg10: memref<1x8x32xbf16, #tpu.memory_space<vmem>>, %arg11: memref<8x32xf32, #tpu.memory_space<vmem>>, %arg12: memref<8x4xf32, #tpu.memory_space<vmem>>, %arg13: memref<8x4xf32, #tpu.memory_space<vmem>>) attributes {dimension_semantics = [#tpu.dimension_semantics<parallel>, #tpu.dimension_semantics<parallel>, #tpu.dimension_semantics<arbitrary>], iteration_bounds = array<i64: 2, 1, 1>, scalar_prefetch = 0 : i64, scratch_operands = 3 : i64, tpu.core_type = #tpu.core_type<tc>, window_params = [{transform_indices = @transform_0, window_bounds = array<i64: 8>}, {pipeline_mode = #tpu.pipeline_mode<synchronous>, transform_indices = @transform_1, window_bounds = array<i64: 32, 4>}, {pipeline_mode = #tpu.pipeline_mode<synchronous>, transform_indices = @transform_2, window_bounds = array<i64: 4, 32>}, {transform_indices = @transform_3, window_bounds = array<i64: 1, 8, 32>}, {transform_indices = @transform_4, window_bounds = array<i64: 1, 32, 8>}, {transform_indices = @transform_5, window_bounds = array<i64: 1, 8, 32>}, {transform_indices = @transform_6, window_bounds = array<i64: 1, 8, 8>}, {transform_indices = @transform_7, window_bounds = array<i64: 1, 8, 32>}]} {
    %c0_i32 = arith.constant 0 : i32
    %0 = arith.cmpi eq, %arg2, %c0_i32 : i32
    %1 = arith.extui %0 : i1 to i32
    %c0_i32_0 = arith.constant 0 : i32
    %2 = arith.cmpi ne, %1, %c0_i32_0 : i32
    scf.if %2 {
      %cst_57 = arith.constant 0xFF800000 : f32
      %447 = vector.broadcast %cst_57 : f32 to vector<8x4xf32>
      %c0_58 = arith.constant 0 : index
      %c0_59 = arith.constant 0 : index
      %448 = vector.load %arg12[%c0_58, %c0_59] : memref<8x4xf32, #tpu.memory_space<vmem>>, vector<8x4xf32>
      tpu.vector_store %arg12[%c0_58, %c0_59], %447 {strides = array<i32>} : memref<8x4xf32, #tpu.memory_space<vmem>>, vector<8x4xf32>,
      %cst_60 = arith.constant 0.000000e+00 : f32
      %449 = vector.broadcast %cst_60 : f32 to vector<8x4xf32>
      %c0_61 = arith.constant 0 : index
      %c0_62 = arith.constant 0 : index
      %450 = vector.load %arg13[%c0_61, %c0_62] : memref<8x4xf32, #tpu.memory_space<vmem>>, vector<8x4xf32>
      tpu.vector_store %arg13[%c0_61, %c0_62], %449 {strides = array<i32>} : memref<8x4xf32, #tpu.memory_space<vmem>>, vector<8x4xf32>,
      %cst_63 = arith.constant 0.000000e+00 : f32
      %451 = vector.broadcast %cst_63 : f32 to vector<8x32xf32>
      %c0_64 = arith.constant 0 : index
      %c0_65 = arith.constant 0 : index
      %452 = vector.load %arg11[%c0_64, %c0_65] : memref<8x32xf32, #tpu.memory_space<vmem>>, vector<8x32xf32>
      tpu.vector_store %arg11[%c0_64, %c0_65], %451 {strides = array<i32>} : memref<8x32xf32, #tpu.memory_space<vmem>>, vector<8x32xf32>,
    } else {
    }
    %c0 = arith.constant 0 : index
    %c0_1 = arith.constant 0 : index
    %c0_2 = arith.constant 0 : index
    %3 = vector.load %arg6[%c0, %c0_1, %c0_2] : memref<1x8x32xbf16, #tpu.memory_space<vmem>>, vector<1x8x32xbf16>
    %4 = vector.shape_cast %3 : vector<1x8x32xbf16> to vector<8x32xbf16>
    %5 = arith.extf %4 : vector<8x32xbf16> to vector<8x32xf32>
    %c0_3 = arith.constant 0 : index
    %c0_4 = arith.constant 0 : index
    %c0_5 = arith.constant 0 : index
    %6 = vector.load %arg7[%c0_3, %c0_4, %c0_5] : memref<1x32x8xbf16, #tpu.memory_space<vmem>>, vector<1x32x8xbf16>
    %7 = vector.shape_cast %6 : vector<1x32x8xbf16> to vector<32x8xbf16>
    %8 = arith.extf %7 : vector<32x8xbf16> to vector<32x8xf32>
    %c0_6 = arith.constant 0 : index
    %c0_7 = arith.constant 0 : index
    %c0_8 = arith.constant 0 : index
    %9 = vector.load %arg8[%c0_6, %c0_7, %c0_8] : memref<1x8x32xbf16, #tpu.memory_space<vmem>>, vector<1x8x32xbf16>
    %10 = vector.shape_cast %9 : vector<1x8x32xbf16> to vector<8x32xbf16>
    %c0_9 = arith.constant 0 : index
    %c0_10 = arith.constant 0 : index
    %c0_11 = arith.constant 0 : index
    %11 = vector.load %arg9[%c0_9, %c0_10, %c0_11] : memref<1x8x8xi8, #tpu.memory_space<vmem>>, vector<1x8x8xi8>
    %12 = vector.shape_cast %11 : vector<1x8x8xi8> to vector<8x8xi8>
    %13 = arith.sitofp %12 : vector<8x8xi8> to vector<8x8xf32>
    %cst = arith.constant -1.000000e+30 : f32
    %14 = vector.broadcast %cst : f32 to vector<8x8xf32>
    %15 = arith.mulf %13, %14 : vector<8x8xf32>
    %c0_12 = arith.constant 0 : index
    %c0_13 = arith.constant 0 : index
    %16 = vector.load %arg4[%c0_12, %c0_13] : memref<32x4xf32, #tpu.memory_space<vmem>>, vector<32x4xf32>
    %cst_14 = arith.constant dense<0.000000e+00> : vector<8x4xf32>
    %17 = tpu.matmul %5, %16, %cst_14 {dimension_numbers = #tpu.dot_dimension_numbers<[1], [0], [0], [1], [0, 0, 1, 1], [], []>} : vector<8x32xf32>, vector<32x4xf32>, vector<8x4xf32> -> vector<8x4xf32>
    %c0_15 = arith.constant 0 : index
    %c0_16 = arith.constant 0 : index
    %18 = vector.load %arg5[%c0_15, %c0_16] : memref<4x32xf32, #tpu.memory_space<vmem>>, vector<4x32xf32>
    %cst_17 = arith.constant dense<0.000000e+00> : vector<4x8xf32>
    %19 = tpu.matmul %18, %8, %cst_17 {dimension_numbers = #tpu.dot_dimension_numbers<[1], [0], [0], [1], [0, 0, 1, 1], [], []>} : vector<4x32xf32>, vector<32x8xf32>, vector<4x8xf32> -> vector<4x8xf32>
    %c0_18 = arith.constant 0 : index
    %20 = memref.load %arg3[%c0_18] : memref<8xf32, #tpu.memory_space<smem>>
    %cst_19 = arith.constant 4.500000e-01 : f32
    %21 = arith.mulf %cst_19, %20 : f32
    %c1 = arith.constant 1 : index
    %22 = memref.load %arg3[%c1] : memref<8xf32, #tpu.memory_space<smem>>
    %cst_20 = arith.constant 4.500000e-01 : f32
    %23 = arith.mulf %cst_20, %22 : f32
    %c2 = arith.constant 2 : index
    %24 = memref.load %arg3[%c2] : memref<8xf32, #tpu.memory_space<smem>>
    %cst_21 = arith.constant 4.500000e-01 : f32
    %25 = arith.mulf %cst_21, %24 : f32
    %c3 = arith.constant 3 : index
    %26 = memref.load %arg3[%c3] : memref<8xf32, #tpu.memory_space<smem>>
    %cst_22 = arith.constant 4.500000e-01 : f32
    %27 = arith.mulf %cst_22, %26 : f32
    %c4 = arith.constant 4 : index
    %28 = memref.load %arg3[%c4] : memref<8xf32, #tpu.memory_space<smem>>
    %cst_23 = arith.constant 4.500000e-01 : f32
    %29 = arith.mulf %cst_23, %28 : f32
    %c5 = arith.constant 5 : index
    %30 = memref.load %arg3[%c5] : memref<8xf32, #tpu.memory_space<smem>>
    %cst_24 = arith.constant 4.500000e-01 : f32
    %31 = arith.mulf %cst_24, %30 : f32
    %c6 = arith.constant 6 : index
    %32 = memref.load %arg3[%c6] : memref<8xf32, #tpu.memory_space<smem>>
    %cst_25 = arith.constant 4.500000e-01 : f32
    %33 = arith.mulf %cst_25, %32 : f32
    %c7 = arith.constant 7 : index
    %34 = memref.load %arg3[%c7] : memref<8xf32, #tpu.memory_space<smem>>
    %cst_26 = arith.constant 4.500000e-01 : f32
    %35 = arith.mulf %cst_26, %34 : f32
    %c0_27 = arith.constant 0 : index
    %c0_28 = arith.constant 0 : index
    %36 = vector.load %arg12[%c0_27, %c0_28] : memref<8x4xf32, #tpu.memory_space<vmem>>, vector<8x4xf32>
    %c0_29 = arith.constant 0 : index
    %c0_30 = arith.constant 0 : index
    %37 = vector.load %arg13[%c0_29, %c0_30] : memref<8x4xf32, #tpu.memory_space<vmem>>, vector<8x4xf32>
    %38 = vector.extract_strided_slice %17 {offsets = [0, 0], sizes = [8, 1], strides = [1, 1]} : vector<8x4xf32> to vector<8x1xf32>
    %39 = vector.extract_strided_slice %19 {offsets = [0, 0], sizes = [1, 8], strides = [1, 1]} : vector<4x8xf32> to vector<1x8xf32>
    %40 = vector.broadcast %38 : vector<8x1xf32> to vector<8x8xf32>
    %41 = vector.broadcast %39 : vector<1x8xf32> to vector<8x8xf32>
    %42 = arith.addf %40, %41 : vector<8x8xf32>
    %cst_31 = arith.constant 5.500000e-01 : f32
    %43 = vector.broadcast %cst_31 : f32 to vector<8x8xf32>
    %44 = arith.mulf %43, %42 : vector<8x8xf32>
    %45 = arith.addf %15, %44 : vector<8x8xf32>
    %46 = vector.extract_strided_slice %5 {offsets = [0, 0], sizes = [8, 1], strides = [1, 1]} : vector<8x32xf32> to vector<8x1xf32>
    %47 = vector.extract_strided_slice %8 {offsets = [0, 0], sizes = [1, 8], strides = [1, 1]} : vector<32x8xf32> to vector<1x8xf32>
    %48 = vector.broadcast %46 : vector<8x1xf32> to vector<8x8xf32>
    %49 = vector.broadcast %47 : vector<1x8xf32> to vector<8x8xf32>
    %50 = arith.addf %48, %49 : vector<8x8xf32>
    %51 = math.absf %50 : vector<8x8xf32>
    %52 = vector.broadcast %21 : f32 to vector<8x8xf32>
    %53 = arith.mulf %52, %51 : vector<8x8xf32>
    %54 = vector.extract_strided_slice %5 {offsets = [0, 1], sizes = [8, 1], strides = [1, 1]} : vector<8x32xf32> to vector<8x1xf32>
    %55 = vector.extract_strided_slice %8 {offsets = [1, 0], sizes = [1, 8], strides = [1, 1]} : vector<32x8xf32> to vector<1x8xf32>
    %56 = vector.broadcast %54 : vector<8x1xf32> to vector<8x8xf32>
    %57 = vector.broadcast %55 : vector<1x8xf32> to vector<8x8xf32>
    %58 = arith.addf %56, %57 : vector<8x8xf32>
    %59 = math.absf %58 : vector<8x8xf32>
    %60 = vector.broadcast %23 : f32 to vector<8x8xf32>
    %61 = arith.mulf %60, %59 : vector<8x8xf32>
    %62 = arith.addf %53, %61 : vector<8x8xf32>
    %63 = vector.extract_strided_slice %5 {offsets = [0, 2], sizes = [8, 1], strides = [1, 1]} : vector<8x32xf32> to vector<8x1xf32>
    %64 = vector.extract_strided_slice %8 {offsets = [2, 0], sizes = [1, 8], strides = [1, 1]} : vector<32x8xf32> to vector<1x8xf32>
    %65 = vector.broadcast %63 : vector<8x1xf32> to vector<8x8xf32>
    %66 = vector.broadcast %64 : vector<1x8xf32> to vector<8x8xf32>
    %67 = arith.addf %65, %66 : vector<8x8xf32>
    %68 = math.absf %67 : vector<8x8xf32>
    %69 = vector.broadcast %25 : f32 to vector<8x8xf32>
    %70 = arith.mulf %69, %68 : vector<8x8xf32>
    %71 = arith.addf %62, %70 : vector<8x8xf32>
    %72 = vector.extract_strided_slice %5 {offsets = [0, 3], sizes = [8, 1], strides = [1, 1]} : vector<8x32xf32> to vector<8x1xf32>
    %73 = vector.extract_strided_slice %8 {offsets = [3, 0], sizes = [1, 8], strides = [1, 1]} : vector<32x8xf32> to vector<1x8xf32>
    %74 = vector.broadcast %72 : vector<8x1xf32> to vector<8x8xf32>
    %75 = vector.broadcast %73 : vector<1x8xf32> to vector<8x8xf32>
    %76 = arith.addf %74, %75 : vector<8x8xf32>
    %77 = math.absf %76 : vector<8x8xf32>
    %78 = vector.broadcast %27 : f32 to vector<8x8xf32>
    %79 = arith.mulf %78, %77 : vector<8x8xf32>
    %80 = arith.addf %71, %79 : vector<8x8xf32>
    %81 = arith.addf %45, %80 : vector<8x8xf32>
    %82 = vector.extract_strided_slice %5 {offsets = [0, 4], sizes = [8, 1], strides = [1, 1]} : vector<8x32xf32> to vector<8x1xf32>
    %83 = vector.extract_strided_slice %8 {offsets = [4, 0], sizes = [1, 8], strides = [1, 1]} : vector<32x8xf32> to vector<1x8xf32>
    %84 = vector.broadcast %82 : vector<8x1xf32> to vector<8x8xf32>
    %85 = vector.broadcast %83 : vector<1x8xf32> to vector<8x8xf32>
    %86 = arith.addf %84, %85 : vector<8x8xf32>
    %87 = math.absf %86 : vector<8x8xf32>
    %88 = vector.broadcast %29 : f32 to vector<8x8xf32>
    %89 = arith.mulf %88, %87 : vector<8x8xf32>
    %90 = vector.extract_strided_slice %5 {offsets = [0, 5], sizes = [8, 1], strides = [1, 1]} : vector<8x32xf32> to vector<8x1xf32>
    %91 = vector.extract_strided_slice %8 {offsets = [5, 0], sizes = [1, 8], strides = [1, 1]} : vector<32x8xf32> to vector<1x8xf32>
    %92 = vector.broadcast %90 : vector<8x1xf32> to vector<8x8xf32>
    %93 = vector.broadcast %91 : vector<1x8xf32> to vector<8x8xf32>
    %94 = arith.addf %92, %93 : vector<8x8xf32>
    %95 = math.absf %94 : vector<8x8xf32>
    %96 = vector.broadcast %31 : f32 to vector<8x8xf32>
    %97 = arith.mulf %96, %95 : vector<8x8xf32>
    %98 = arith.addf %89, %97 : vector<8x8xf32>
    %99 = vector.extract_strided_slice %5 {offsets = [0, 6], sizes = [8, 1], strides = [1, 1]} : vector<8x32xf32> to vector<8x1xf32>
    %100 = vector.extract_strided_slice %8 {offsets = [6, 0], sizes = [1, 8], strides = [1, 1]} : vector<32x8xf32> to vector<1x8xf32>
    %101 = vector.broadcast %99 : vector<8x1xf32> to vector<8x8xf32>
    %102 = vector.broadcast %100 : vector<1x8xf32> to vector<8x8xf32>
    %103 = arith.addf %101, %102 : vector<8x8xf32>
    %104 = math.absf %103 : vector<8x8xf32>
    %105 = vector.broadcast %33 : f32 to vector<8x8xf32>
    %106 = arith.mulf %105, %104 : vector<8x8xf32>
    %107 = arith.addf %98, %106 : vector<8x8xf32>
    %108 = vector.extract_strided_slice %5 {offsets = [0, 7], sizes = [8, 1], strides = [1, 1]} : vector<8x32xf32> to vector<8x1xf32>
    %109 = vector.extract_strided_slice %8 {offsets = [7, 0], sizes = [1, 8], strides = [1, 1]} : vector<32x8xf32> to vector<1x8xf32>
    %110 = vector.broadcast %108 : vector<8x1xf32> to vector<8x8xf32>
    %111 = vector.broadcast %109 : vector<1x8xf32> to vector<8x8xf32>
    %112 = arith.addf %110, %111 : vector<8x8xf32>
    %113 = math.absf %112 : vector<8x8xf32>
    %114 = vector.broadcast %35 : f32 to vector<8x8xf32>
    %115 = arith.mulf %114, %113 : vector<8x8xf32>
    %116 = arith.addf %107, %115 : vector<8x8xf32>
    %117 = arith.addf %81, %116 : vector<8x8xf32>
    %118 = vector.extract_strided_slice %36 {offsets = [0, 0], sizes = [8, 1], strides = [1, 1]} : vector<8x4xf32> to vector<8x1xf32>
    %119 = vector.extract_strided_slice %37 {offsets = [0, 0], sizes = [8, 1], strides = [1, 1]} : vector<8x4xf32> to vector<8x1xf32>
    %cst_32 = arith.constant dense<0xFF800000> : vector<8xf32>
    %120 = vector.multi_reduction <maximumf>, %117, %cst_32 [1] : vector<8x8xf32> to vector<8xf32>
    %121 = vector.shape_cast %120 : vector<8xf32> to vector<8x1xf32>
    %122 = arith.maximumf %118, %121 : vector<8x1xf32>
    %123 = arith.subf %118, %122 : vector<8x1xf32>
    %124 = math.exp %123 : vector<8x1xf32>
    %125 = vector.broadcast %122 : vector<8x1xf32> to vector<8x8xf32>
    %126 = arith.subf %117, %125 : vector<8x8xf32>
    %127 = math.exp %126 : vector<8x8xf32>
    %128 = arith.mulf %124, %119 : vector<8x1xf32>
    %cst_33 = arith.constant dense<0.000000e+00> : vector<8xf32>
    %129 = vector.multi_reduction <add>, %127, %cst_33 [1] : vector<8x8xf32> to vector<8xf32>
    %130 = vector.shape_cast %129 : vector<8xf32> to vector<8x1xf32>
    %131 = arith.addf %128, %130 : vector<8x1xf32>
    %132 = arith.truncf %127 : vector<8x8xf32> to vector<8x8xbf16>
    %133 = vector.extract_strided_slice %10 {offsets = [0, 0], sizes = [8, 8], strides = [1, 1]} : vector<8x32xbf16> to vector<8x8xbf16>
    %cst_34 = arith.constant dense<0.000000e+00> : vector<8x8xf32>
    %134 = tpu.matmul %132, %133, %cst_34 {dimension_numbers = #tpu.dot_dimension_numbers<[1], [0], [0], [1], [0, 0, 1, 1], [], []>} : vector<8x8xbf16>, vector<8x8xbf16>, vector<8x8xf32> -> vector<8x8xf32>
    %135 = vector.extract_strided_slice %17 {offsets = [0, 1], sizes = [8, 1], strides = [1, 1]} : vector<8x4xf32> to vector<8x1xf32>
    %136 = vector.extract_strided_slice %19 {offsets = [1, 0], sizes = [1, 8], strides = [1, 1]} : vector<4x8xf32> to vector<1x8xf32>
    %137 = vector.broadcast %135 : vector<8x1xf32> to vector<8x8xf32>
    %138 = vector.broadcast %136 : vector<1x8xf32> to vector<8x8xf32>
    %139 = arith.addf %137, %138 : vector<8x8xf32>
    %cst_35 = arith.constant 5.500000e-01 : f32
    %140 = vector.broadcast %cst_35 : f32 to vector<8x8xf32>
    %141 = arith.mulf %140, %139 : vector<8x8xf32>
    %142 = arith.addf %15, %141 : vector<8x8xf32>
    %143 = vector.extract_strided_slice %5 {offsets = [0, 8], sizes = [8, 1], strides = [1, 1]} : vector<8x32xf32> to vector<8x1xf32>
    %144 = vector.extract_strided_slice %8 {offsets = [8, 0], sizes = [1, 8], strides = [1, 1]} : vector<32x8xf32> to vector<1x8xf32>
    %145 = vector.broadcast %143 : vector<8x1xf32> to vector<8x8xf32>
    %146 = vector.broadcast %144 : vector<1x8xf32> to vector<8x8xf32>
    %147 = arith.addf %145, %146 : vector<8x8xf32>
    %148 = math.absf %147 : vector<8x8xf32>
    %149 = vector.broadcast %21 : f32 to vector<8x8xf32>
    %150 = arith.mulf %149, %148 : vector<8x8xf32>
    %151 = vector.extract_strided_slice %5 {offsets = [0, 9], sizes = [8, 1], strides = [1, 1]} : vector<8x32xf32> to vector<8x1xf32>
    %152 = vector.extract_strided_slice %8 {offsets = [9, 0], sizes = [1, 8], strides = [1, 1]} : vector<32x8xf32> to vector<1x8xf32>
    %153 = vector.broadcast %151 : vector<8x1xf32> to vector<8x8xf32>
    %154 = vector.broadcast %152 : vector<1x8xf32> to vector<8x8xf32>
    %155 = arith.addf %153, %154 : vector<8x8xf32>
    %156 = math.absf %155 : vector<8x8xf32>
    %157 = vector.broadcast %23 : f32 to vector<8x8xf32>
    %158 = arith.mulf %157, %156 : vector<8x8xf32>
    %159 = arith.addf %150, %158 : vector<8x8xf32>
    %160 = vector.extract_strided_slice %5 {offsets = [0, 10], sizes = [8, 1], strides = [1, 1]} : vector<8x32xf32> to vector<8x1xf32>
    %161 = vector.extract_strided_slice %8 {offsets = [10, 0], sizes = [1, 8], strides = [1, 1]} : vector<32x8xf32> to vector<1x8xf32>
    %162 = vector.broadcast %160 : vector<8x1xf32> to vector<8x8xf32>
    %163 = vector.broadcast %161 : vector<1x8xf32> to vector<8x8xf32>
    %164 = arith.addf %162, %163 : vector<8x8xf32>
    %165 = math.absf %164 : vector<8x8xf32>
    %166 = vector.broadcast %25 : f32 to vector<8x8xf32>
    %167 = arith.mulf %166, %165 : vector<8x8xf32>
    %168 = arith.addf %159, %167 : vector<8x8xf32>
    %169 = vector.extract_strided_slice %5 {offsets = [0, 11], sizes = [8, 1], strides = [1, 1]} : vector<8x32xf32> to vector<8x1xf32>
    %170 = vector.extract_strided_slice %8 {offsets = [11, 0], sizes = [1, 8], strides = [1, 1]} : vector<32x8xf32> to vector<1x8xf32>
    %171 = vector.broadcast %169 : vector<8x1xf32> to vector<8x8xf32>
    %172 = vector.broadcast %170 : vector<1x8xf32> to vector<8x8xf32>
    %173 = arith.addf %171, %172 : vector<8x8xf32>
    %174 = math.absf %173 : vector<8x8xf32>
    %175 = vector.broadcast %27 : f32 to vector<8x8xf32>
    %176 = arith.mulf %175, %174 : vector<8x8xf32>
    %177 = arith.addf %168, %176 : vector<8x8xf32>
    %178 = arith.addf %142, %177 : vector<8x8xf32>
    %179 = vector.extract_strided_slice %5 {offsets = [0, 12], sizes = [8, 1], strides = [1, 1]} : vector<8x32xf32> to vector<8x1xf32>
    %180 = vector.extract_strided_slice %8 {offsets = [12, 0], sizes = [1, 8], strides = [1, 1]} : vector<32x8xf32> to vector<1x8xf32>
    %181 = vector.broadcast %179 : vector<8x1xf32> to vector<8x8xf32>
    %182 = vector.broadcast %180 : vector<1x8xf32> to vector<8x8xf32>
    %183 = arith.addf %181, %182 : vector<8x8xf32>
    %184 = math.absf %183 : vector<8x8xf32>
    %185 = vector.broadcast %29 : f32 to vector<8x8xf32>
    %186 = arith.mulf %185, %184 : vector<8x8xf32>
    %187 = vector.extract_strided_slice %5 {offsets = [0, 13], sizes = [8, 1], strides = [1, 1]} : vector<8x32xf32> to vector<8x1xf32>
    %188 = vector.extract_strided_slice %8 {offsets = [13, 0], sizes = [1, 8], strides = [1, 1]} : vector<32x8xf32> to vector<1x8xf32>
    %189 = vector.broadcast %187 : vector<8x1xf32> to vector<8x8xf32>
    %190 = vector.broadcast %188 : vector<1x8xf32> to vector<8x8xf32>
    %191 = arith.addf %189, %190 : vector<8x8xf32>
    %192 = math.absf %191 : vector<8x8xf32>
    %193 = vector.broadcast %31 : f32 to vector<8x8xf32>
    %194 = arith.mulf %193, %192 : vector<8x8xf32>
    %195 = arith.addf %186, %194 : vector<8x8xf32>
    %196 = vector.extract_strided_slice %5 {offsets = [0, 14], sizes = [8, 1], strides = [1, 1]} : vector<8x32xf32> to vector<8x1xf32>
    %197 = vector.extract_strided_slice %8 {offsets = [14, 0], sizes = [1, 8], strides = [1, 1]} : vector<32x8xf32> to vector<1x8xf32>
    %198 = vector.broadcast %196 : vector<8x1xf32> to vector<8x8xf32>
    %199 = vector.broadcast %197 : vector<1x8xf32> to vector<8x8xf32>
    %200 = arith.addf %198, %199 : vector<8x8xf32>
    %201 = math.absf %200 : vector<8x8xf32>
    %202 = vector.broadcast %33 : f32 to vector<8x8xf32>
    %203 = arith.mulf %202, %201 : vector<8x8xf32>
    %204 = arith.addf %195, %203 : vector<8x8xf32>
    %205 = vector.extract_strided_slice %5 {offsets = [0, 15], sizes = [8, 1], strides = [1, 1]} : vector<8x32xf32> to vector<8x1xf32>
    %206 = vector.extract_strided_slice %8 {offsets = [15, 0], sizes = [1, 8], strides = [1, 1]} : vector<32x8xf32> to vector<1x8xf32>
    %207 = vector.broadcast %205 : vector<8x1xf32> to vector<8x8xf32>
    %208 = vector.broadcast %206 : vector<1x8xf32> to vector<8x8xf32>
    %209 = arith.addf %207, %208 : vector<8x8xf32>
    %210 = math.absf %209 : vector<8x8xf32>
    %211 = vector.broadcast %35 : f32 to vector<8x8xf32>
    %212 = arith.mulf %211, %210 : vector<8x8xf32>
    %213 = arith.addf %204, %212 : vector<8x8xf32>
    %214 = arith.addf %178, %213 : vector<8x8xf32>
    %215 = vector.extract_strided_slice %36 {offsets = [0, 1], sizes = [8, 1], strides = [1, 1]} : vector<8x4xf32> to vector<8x1xf32>
    %216 = vector.extract_strided_slice %37 {offsets = [0, 1], sizes = [8, 1], strides = [1, 1]} : vector<8x4xf32> to vector<8x1xf32>
    %cst_36 = arith.constant dense<0xFF800000> : vector<8xf32>
    %217 = vector.multi_reduction <maximumf>, %214, %cst_36 [1] : vector<8x8xf32> to vector<8xf32>
    %218 = vector.shape_cast %217 : vector<8xf32> to vector<8x1xf32>
    %219 = arith.maximumf %215, %218 : vector<8x1xf32>
    %220 = arith.subf %215, %219 : vector<8x1xf32>
    %221 = math.exp %220 : vector<8x1xf32>
    %222 = vector.broadcast %219 : vector<8x1xf32> to vector<8x8xf32>
    %223 = arith.subf %214, %222 : vector<8x8xf32>
    %224 = math.exp %223 : vector<8x8xf32>
    %225 = arith.mulf %221, %216 : vector<8x1xf32>
    %cst_37 = arith.constant dense<0.000000e+00> : vector<8xf32>
    %226 = vector.multi_reduction <add>, %224, %cst_37 [1] : vector<8x8xf32> to vector<8xf32>
    %227 = vector.shape_cast %226 : vector<8xf32> to vector<8x1xf32>
    %228 = arith.addf %225, %227 : vector<8x1xf32>
    %229 = arith.truncf %224 : vector<8x8xf32> to vector<8x8xbf16>
    %230 = vector.extract_strided_slice %10 {offsets = [0, 8], sizes = [8, 8], strides = [1, 1]} : vector<8x32xbf16> to vector<8x8xbf16>
    %cst_38 = arith.constant dense<0.000000e+00> : vector<8x8xf32>
    %231 = tpu.matmul %229, %230, %cst_38 {dimension_numbers = #tpu.dot_dimension_numbers<[1], [0], [0], [1], [0, 0, 1, 1], [], []>} : vector<8x8xbf16>, vector<8x8xbf16>, vector<8x8xf32> -> vector<8x8xf32>
    %232 = vector.extract_strided_slice %17 {offsets = [0, 2], sizes = [8, 1], strides = [1, 1]} : vector<8x4xf32> to vector<8x1xf32>
    %233 = vector.extract_strided_slice %19 {offsets = [2, 0], sizes = [1, 8], strides = [1, 1]} : vector<4x8xf32> to vector<1x8xf32>
    %234 = vector.broadcast %232 : vector<8x1xf32> to vector<8x8xf32>
    %235 = vector.broadcast %233 : vector<1x8xf32> to vector<8x8xf32>
    %236 = arith.addf %234, %235 : vector<8x8xf32>
    %cst_39 = arith.constant 5.500000e-01 : f32
    %237 = vector.broadcast %cst_39 : f32 to vector<8x8xf32>
    %238 = arith.mulf %237, %236 : vector<8x8xf32>
    %239 = arith.addf %15, %238 : vector<8x8xf32>
    %240 = vector.extract_strided_slice %5 {offsets = [0, 16], sizes = [8, 1], strides = [1, 1]} : vector<8x32xf32> to vector<8x1xf32>
    %241 = vector.extract_strided_slice %8 {offsets = [16, 0], sizes = [1, 8], strides = [1, 1]} : vector<32x8xf32> to vector<1x8xf32>
    %242 = vector.broadcast %240 : vector<8x1xf32> to vector<8x8xf32>
    %243 = vector.broadcast %241 : vector<1x8xf32> to vector<8x8xf32>
    %244 = arith.addf %242, %243 : vector<8x8xf32>
    %245 = math.absf %244 : vector<8x8xf32>
    %246 = vector.broadcast %21 : f32 to vector<8x8xf32>
    %247 = arith.mulf %246, %245 : vector<8x8xf32>
    %248 = vector.extract_strided_slice %5 {offsets = [0, 17], sizes = [8, 1], strides = [1, 1]} : vector<8x32xf32> to vector<8x1xf32>
    %249 = vector.extract_strided_slice %8 {offsets = [17, 0], sizes = [1, 8], strides = [1, 1]} : vector<32x8xf32> to vector<1x8xf32>
    %250 = vector.broadcast %248 : vector<8x1xf32> to vector<8x8xf32>
    %251 = vector.broadcast %249 : vector<1x8xf32> to vector<8x8xf32>
    %252 = arith.addf %250, %251 : vector<8x8xf32>
    %253 = math.absf %252 : vector<8x8xf32>
    %254 = vector.broadcast %23 : f32 to vector<8x8xf32>
    %255 = arith.mulf %254, %253 : vector<8x8xf32>
    %256 = arith.addf %247, %255 : vector<8x8xf32>
    %257 = vector.extract_strided_slice %5 {offsets = [0, 18], sizes = [8, 1], strides = [1, 1]} : vector<8x32xf32> to vector<8x1xf32>
    %258 = vector.extract_strided_slice %8 {offsets = [18, 0], sizes = [1, 8], strides = [1, 1]} : vector<32x8xf32> to vector<1x8xf32>
    %259 = vector.broadcast %257 : vector<8x1xf32> to vector<8x8xf32>
    %260 = vector.broadcast %258 : vector<1x8xf32> to vector<8x8xf32>
    %261 = arith.addf %259, %260 : vector<8x8xf32>
    %262 = math.absf %261 : vector<8x8xf32>
    %263 = vector.broadcast %25 : f32 to vector<8x8xf32>
    %264 = arith.mulf %263, %262 : vector<8x8xf32>
    %265 = arith.addf %256, %264 : vector<8x8xf32>
    %266 = vector.extract_strided_slice %5 {offsets = [0, 19], sizes = [8, 1], strides = [1, 1]} : vector<8x32xf32> to vector<8x1xf32>
    %267 = vector.extract_strided_slice %8 {offsets = [19, 0], sizes = [1, 8], strides = [1, 1]} : vector<32x8xf32> to vector<1x8xf32>
    %268 = vector.broadcast %266 : vector<8x1xf32> to vector<8x8xf32>
    %269 = vector.broadcast %267 : vector<1x8xf32> to vector<8x8xf32>
    %270 = arith.addf %268, %269 : vector<8x8xf32>
    %271 = math.absf %270 : vector<8x8xf32>
    %272 = vector.broadcast %27 : f32 to vector<8x8xf32>
    %273 = arith.mulf %272, %271 : vector<8x8xf32>
    %274 = arith.addf %265, %273 : vector<8x8xf32>
    %275 = arith.addf %239, %274 : vector<8x8xf32>
    %276 = vector.extract_strided_slice %5 {offsets = [0, 20], sizes = [8, 1], strides = [1, 1]} : vector<8x32xf32> to vector<8x1xf32>
    %277 = vector.extract_strided_slice %8 {offsets = [20, 0], sizes = [1, 8], strides = [1, 1]} : vector<32x8xf32> to vector<1x8xf32>
    %278 = vector.broadcast %276 : vector<8x1xf32> to vector<8x8xf32>
    %279 = vector.broadcast %277 : vector<1x8xf32> to vector<8x8xf32>
    %280 = arith.addf %278, %279 : vector<8x8xf32>
    %281 = math.absf %280 : vector<8x8xf32>
    %282 = vector.broadcast %29 : f32 to vector<8x8xf32>
    %283 = arith.mulf %282, %281 : vector<8x8xf32>
    %284 = vector.extract_strided_slice %5 {offsets = [0, 21], sizes = [8, 1], strides = [1, 1]} : vector<8x32xf32> to vector<8x1xf32>
    %285 = vector.extract_strided_slice %8 {offsets = [21, 0], sizes = [1, 8], strides = [1, 1]} : vector<32x8xf32> to vector<1x8xf32>
    %286 = vector.broadcast %284 : vector<8x1xf32> to vector<8x8xf32>
    %287 = vector.broadcast %285 : vector<1x8xf32> to vector<8x8xf32>
    %288 = arith.addf %286, %287 : vector<8x8xf32>
    %289 = math.absf %288 : vector<8x8xf32>
    %290 = vector.broadcast %31 : f32 to vector<8x8xf32>
    %291 = arith.mulf %290, %289 : vector<8x8xf32>
    %292 = arith.addf %283, %291 : vector<8x8xf32>
    %293 = vector.extract_strided_slice %5 {offsets = [0, 22], sizes = [8, 1], strides = [1, 1]} : vector<8x32xf32> to vector<8x1xf32>
    %294 = vector.extract_strided_slice %8 {offsets = [22, 0], sizes = [1, 8], strides = [1, 1]} : vector<32x8xf32> to vector<1x8xf32>
    %295 = vector.broadcast %293 : vector<8x1xf32> to vector<8x8xf32>
    %296 = vector.broadcast %294 : vector<1x8xf32> to vector<8x8xf32>
    %297 = arith.addf %295, %296 : vector<8x8xf32>
    %298 = math.absf %297 : vector<8x8xf32>
    %299 = vector.broadcast %33 : f32 to vector<8x8xf32>
    %300 = arith.mulf %299, %298 : vector<8x8xf32>
    %301 = arith.addf %292, %300 : vector<8x8xf32>
    %302 = vector.extract_strided_slice %5 {offsets = [0, 23], sizes = [8, 1], strides = [1, 1]} : vector<8x32xf32> to vector<8x1xf32>
    %303 = vector.extract_strided_slice %8 {offsets = [23, 0], sizes = [1, 8], strides = [1, 1]} : vector<32x8xf32> to vector<1x8xf32>
    %304 = vector.broadcast %302 : vector<8x1xf32> to vector<8x8xf32>
    %305 = vector.broadcast %303 : vector<1x8xf32> to vector<8x8xf32>
    %306 = arith.addf %304, %305 : vector<8x8xf32>
    %307 = math.absf %306 : vector<8x8xf32>
    %308 = vector.broadcast %35 : f32 to vector<8x8xf32>
    %309 = arith.mulf %308, %307 : vector<8x8xf32>
    %310 = arith.addf %301, %309 : vector<8x8xf32>
    %311 = arith.addf %275, %310 : vector<8x8xf32>
    %312 = vector.extract_strided_slice %36 {offsets = [0, 2], sizes = [8, 1], strides = [1, 1]} : vector<8x4xf32> to vector<8x1xf32>
    %313 = vector.extract_strided_slice %37 {offsets = [0, 2], sizes = [8, 1], strides = [1, 1]} : vector<8x4xf32> to vector<8x1xf32>
    %cst_40 = arith.constant dense<0xFF800000> : vector<8xf32>
    %314 = vector.multi_reduction <maximumf>, %311, %cst_40 [1] : vector<8x8xf32> to vector<8xf32>
    %315 = vector.shape_cast %314 : vector<8xf32> to vector<8x1xf32>
    %316 = arith.maximumf %312, %315 : vector<8x1xf32>
    %317 = arith.subf %312, %316 : vector<8x1xf32>
    %318 = math.exp %317 : vector<8x1xf32>
    %319 = vector.broadcast %316 : vector<8x1xf32> to vector<8x8xf32>
    %320 = arith.subf %311, %319 : vector<8x8xf32>
    %321 = math.exp %320 : vector<8x8xf32>
    %322 = arith.mulf %318, %313 : vector<8x1xf32>
    %cst_41 = arith.constant dense<0.000000e+00> : vector<8xf32>
    %323 = vector.multi_reduction <add>, %321, %cst_41 [1] : vector<8x8xf32> to vector<8xf32>
    %324 = vector.shape_cast %323 : vector<8xf32> to vector<8x1xf32>
    %325 = arith.addf %322, %324 : vector<8x1xf32>
    %326 = arith.truncf %321 : vector<8x8xf32> to vector<8x8xbf16>
    %327 = vector.extract_strided_slice %10 {offsets = [0, 16], sizes = [8, 8], strides = [1, 1]} : vector<8x32xbf16> to vector<8x8xbf16>
    %cst_42 = arith.constant dense<0.000000e+00> : vector<8x8xf32>
    %328 = tpu.matmul %326, %327, %cst_42 {dimension_numbers = #tpu.dot_dimension_numbers<[1], [0], [0], [1], [0, 0, 1, 1], [], []>} : vector<8x8xbf16>, vector<8x8xbf16>, vector<8x8xf32> -> vector<8x8xf32>
    %329 = vector.extract_strided_slice %17 {offsets = [0, 3], sizes = [8, 1], strides = [1, 1]} : vector<8x4xf32> to vector<8x1xf32>
    %330 = vector.extract_strided_slice %19 {offsets = [3, 0], sizes = [1, 8], strides = [1, 1]} : vector<4x8xf32> to vector<1x8xf32>
    %331 = vector.broadcast %329 : vector<8x1xf32> to vector<8x8xf32>
    %332 = vector.broadcast %330 : vector<1x8xf32> to vector<8x8xf32>
    %333 = arith.addf %331, %332 : vector<8x8xf32>
    %cst_43 = arith.constant 5.500000e-01 : f32
    %334 = vector.broadcast %cst_43 : f32 to vector<8x8xf32>
    %335 = arith.mulf %334, %333 : vector<8x8xf32>
    %336 = arith.addf %15, %335 : vector<8x8xf32>
    %337 = vector.extract_strided_slice %5 {offsets = [0, 24], sizes = [8, 1], strides = [1, 1]} : vector<8x32xf32> to vector<8x1xf32>
    %338 = vector.extract_strided_slice %8 {offsets = [24, 0], sizes = [1, 8], strides = [1, 1]} : vector<32x8xf32> to vector<1x8xf32>
    %339 = vector.broadcast %337 : vector<8x1xf32> to vector<8x8xf32>
    %340 = vector.broadcast %338 : vector<1x8xf32> to vector<8x8xf32>
    %341 = arith.addf %339, %340 : vector<8x8xf32>
    %342 = math.absf %341 : vector<8x8xf32>
    %343 = vector.broadcast %21 : f32 to vector<8x8xf32>
    %344 = arith.mulf %343, %342 : vector<8x8xf32>
    %345 = vector.extract_strided_slice %5 {offsets = [0, 25], sizes = [8, 1], strides = [1, 1]} : vector<8x32xf32> to vector<8x1xf32>
    %346 = vector.extract_strided_slice %8 {offsets = [25, 0], sizes = [1, 8], strides = [1, 1]} : vector<32x8xf32> to vector<1x8xf32>
    %347 = vector.broadcast %345 : vector<8x1xf32> to vector<8x8xf32>
    %348 = vector.broadcast %346 : vector<1x8xf32> to vector<8x8xf32>
    %349 = arith.addf %347, %348 : vector<8x8xf32>
    %350 = math.absf %349 : vector<8x8xf32>
    %351 = vector.broadcast %23 : f32 to vector<8x8xf32>
    %352 = arith.mulf %351, %350 : vector<8x8xf32>
    %353 = arith.addf %344, %352 : vector<8x8xf32>
    %354 = vector.extract_strided_slice %5 {offsets = [0, 26], sizes = [8, 1], strides = [1, 1]} : vector<8x32xf32> to vector<8x1xf32>
    %355 = vector.extract_strided_slice %8 {offsets = [26, 0], sizes = [1, 8], strides = [1, 1]} : vector<32x8xf32> to vector<1x8xf32>
    %356 = vector.broadcast %354 : vector<8x1xf32> to vector<8x8xf32>
    %357 = vector.broadcast %355 : vector<1x8xf32> to vector<8x8xf32>
    %358 = arith.addf %356, %357 : vector<8x8xf32>
    %359 = math.absf %358 : vector<8x8xf32>
    %360 = vector.broadcast %25 : f32 to vector<8x8xf32>
    %361 = arith.mulf %360, %359 : vector<8x8xf32>
    %362 = arith.addf %353, %361 : vector<8x8xf32>
    %363 = vector.extract_strided_slice %5 {offsets = [0, 27], sizes = [8, 1], strides = [1, 1]} : vector<8x32xf32> to vector<8x1xf32>
    %364 = vector.extract_strided_slice %8 {offsets = [27, 0], sizes = [1, 8], strides = [1, 1]} : vector<32x8xf32> to vector<1x8xf32>
    %365 = vector.broadcast %363 : vector<8x1xf32> to vector<8x8xf32>
    %366 = vector.broadcast %364 : vector<1x8xf32> to vector<8x8xf32>
    %367 = arith.addf %365, %366 : vector<8x8xf32>
    %368 = math.absf %367 : vector<8x8xf32>
    %369 = vector.broadcast %27 : f32 to vector<8x8xf32>
    %370 = arith.mulf %369, %368 : vector<8x8xf32>
    %371 = arith.addf %362, %370 : vector<8x8xf32>
    %372 = arith.addf %336, %371 : vector<8x8xf32>
    %373 = vector.extract_strided_slice %5 {offsets = [0, 28], sizes = [8, 1], strides = [1, 1]} : vector<8x32xf32> to vector<8x1xf32>
    %374 = vector.extract_strided_slice %8 {offsets = [28, 0], sizes = [1, 8], strides = [1, 1]} : vector<32x8xf32> to vector<1x8xf32>
    %375 = vector.broadcast %373 : vector<8x1xf32> to vector<8x8xf32>
    %376 = vector.broadcast %374 : vector<1x8xf32> to vector<8x8xf32>
    %377 = arith.addf %375, %376 : vector<8x8xf32>
    %378 = math.absf %377 : vector<8x8xf32>
    %379 = vector.broadcast %29 : f32 to vector<8x8xf32>
    %380 = arith.mulf %379, %378 : vector<8x8xf32>
    %381 = vector.extract_strided_slice %5 {offsets = [0, 29], sizes = [8, 1], strides = [1, 1]} : vector<8x32xf32> to vector<8x1xf32>
    %382 = vector.extract_strided_slice %8 {offsets = [29, 0], sizes = [1, 8], strides = [1, 1]} : vector<32x8xf32> to vector<1x8xf32>
    %383 = vector.broadcast %381 : vector<8x1xf32> to vector<8x8xf32>
    %384 = vector.broadcast %382 : vector<1x8xf32> to vector<8x8xf32>
    %385 = arith.addf %383, %384 : vector<8x8xf32>
    %386 = math.absf %385 : vector<8x8xf32>
    %387 = vector.broadcast %31 : f32 to vector<8x8xf32>
    %388 = arith.mulf %387, %386 : vector<8x8xf32>
    %389 = arith.addf %380, %388 : vector<8x8xf32>
    %390 = vector.extract_strided_slice %5 {offsets = [0, 30], sizes = [8, 1], strides = [1, 1]} : vector<8x32xf32> to vector<8x1xf32>
    %391 = vector.extract_strided_slice %8 {offsets = [30, 0], sizes = [1, 8], strides = [1, 1]} : vector<32x8xf32> to vector<1x8xf32>
    %392 = vector.broadcast %390 : vector<8x1xf32> to vector<8x8xf32>
    %393 = vector.broadcast %391 : vector<1x8xf32> to vector<8x8xf32>
    %394 = arith.addf %392, %393 : vector<8x8xf32>
    %395 = math.absf %394 : vector<8x8xf32>
    %396 = vector.broadcast %33 : f32 to vector<8x8xf32>
    %397 = arith.mulf %396, %395 : vector<8x8xf32>
    %398 = arith.addf %389, %397 : vector<8x8xf32>
    %399 = vector.extract_strided_slice %5 {offsets = [0, 31], sizes = [8, 1], strides = [1, 1]} : vector<8x32xf32> to vector<8x1xf32>
    %400 = vector.extract_strided_slice %8 {offsets = [31, 0], sizes = [1, 8], strides = [1, 1]} : vector<32x8xf32> to vector<1x8xf32>
    %401 = vector.broadcast %399 : vector<8x1xf32> to vector<8x8xf32>
    %402 = vector.broadcast %400 : vector<1x8xf32> to vector<8x8xf32>
    %403 = arith.addf %401, %402 : vector<8x8xf32>
    %404 = math.absf %403 : vector<8x8xf32>
    %405 = vector.broadcast %35 : f32 to vector<8x8xf32>
    %406 = arith.mulf %405, %404 : vector<8x8xf32>
    %407 = arith.addf %398, %406 : vector<8x8xf32>
    %408 = arith.addf %372, %407 : vector<8x8xf32>
    %409 = vector.extract_strided_slice %36 {offsets = [0, 3], sizes = [8, 1], strides = [1, 1]} : vector<8x4xf32> to vector<8x1xf32>
    %410 = vector.extract_strided_slice %37 {offsets = [0, 3], sizes = [8, 1], strides = [1, 1]} : vector<8x4xf32> to vector<8x1xf32>
    %cst_44 = arith.constant dense<0xFF800000> : vector<8xf32>
    %411 = vector.multi_reduction <maximumf>, %408, %cst_44 [1] : vector<8x8xf32> to vector<8xf32>
    %412 = vector.shape_cast %411 : vector<8xf32> to vector<8x1xf32>
    %413 = arith.maximumf %409, %412 : vector<8x1xf32>
    %414 = arith.subf %409, %413 : vector<8x1xf32>
    %415 = math.exp %414 : vector<8x1xf32>
    %416 = vector.broadcast %413 : vector<8x1xf32> to vector<8x8xf32>
    %417 = arith.subf %408, %416 : vector<8x8xf32>
    %418 = math.exp %417 : vector<8x8xf32>
    %419 = arith.mulf %415, %410 : vector<8x1xf32>
    %cst_45 = arith.constant dense<0.000000e+00> : vector<8xf32>
    %420 = vector.multi_reduction <add>, %418, %cst_45 [1] : vector<8x8xf32> to vector<8xf32>
    %421 = vector.shape_cast %420 : vector<8xf32> to vector<8x1xf32>
    %422 = arith.addf %419, %421 : vector<8x1xf32>
    %423 = arith.truncf %418 : vector<8x8xf32> to vector<8x8xbf16>
    %424 = vector.extract_strided_slice %10 {offsets = [0, 24], sizes = [8, 8], strides = [1, 1]} : vector<8x32xbf16> to vector<8x8xbf16>
    %cst_46 = arith.constant dense<0.000000e+00> : vector<8x8xf32>
    %425 = tpu.matmul %423, %424, %cst_46 {dimension_numbers = #tpu.dot_dimension_numbers<[1], [0], [0], [1], [0, 0, 1, 1], [], []>} : vector<8x8xbf16>, vector<8x8xbf16>, vector<8x8xf32> -> vector<8x8xf32>
    %426 = tpu.concatenate %122, %219, %316, %413 in 1 : vector<8x1xf32>, vector<8x1xf32>, vector<8x1xf32>, vector<8x1xf32> -> vector<8x4xf32>
    %c0_47 = arith.constant 0 : index
    %c0_48 = arith.constant 0 : index
    %427 = vector.load %arg12[%c0_47, %c0_48] : memref<8x4xf32, #tpu.memory_space<vmem>>, vector<8x4xf32>
    tpu.vector_store %arg12[%c0_47, %c0_48], %426 {strides = array<i32>} : memref<8x4xf32, #tpu.memory_space<vmem>>, vector<8x4xf32>,
    %428 = tpu.concatenate %131, %228, %325, %422 in 1 : vector<8x1xf32>, vector<8x1xf32>, vector<8x1xf32>, vector<8x1xf32> -> vector<8x4xf32>
    %c0_49 = arith.constant 0 : index
    %c0_50 = arith.constant 0 : index
    %429 = vector.load %arg13[%c0_49, %c0_50] : memref<8x4xf32, #tpu.memory_space<vmem>>, vector<8x4xf32>
    tpu.vector_store %arg13[%c0_49, %c0_50], %428 {strides = array<i32>} : memref<8x4xf32, #tpu.memory_space<vmem>>, vector<8x4xf32>,
    %430 = vector.shape_cast %124 : vector<8x1xf32> to vector<8x1xf32>
    %431 = vector.broadcast %430 : vector<8x1xf32> to vector<8x8xf32>
    %432 = vector.shape_cast %221 : vector<8x1xf32> to vector<8x1xf32>
    %433 = vector.broadcast %432 : vector<8x1xf32> to vector<8x8xf32>
    %434 = vector.shape_cast %318 : vector<8x1xf32> to vector<8x1xf32>
    %435 = vector.broadcast %434 : vector<8x1xf32> to vector<8x8xf32>
    %436 = vector.shape_cast %415 : vector<8x1xf32> to vector<8x1xf32>
    %437 = vector.broadcast %436 : vector<8x1xf32> to vector<8x8xf32>
    %438 = tpu.concatenate %431, %433, %435, %437 in 1 : vector<8x8xf32>, vector<8x8xf32>, vector<8x8xf32>, vector<8x8xf32> -> vector<8x32xf32>
    %439 = tpu.concatenate %134, %231, %328, %425 in 1 : vector<8x8xf32>, vector<8x8xf32>, vector<8x8xf32>, vector<8x8xf32> -> vector<8x32xf32>
    %c0_51 = arith.constant 0 : index
    %c0_52 = arith.constant 0 : index
    %440 = vector.load %arg11[%c0_51, %c0_52] : memref<8x32xf32, #tpu.memory_space<vmem>>, vector<8x32xf32>
    %441 = arith.mulf %438, %440 : vector<8x32xf32>
    %442 = arith.addf %441, %439 : vector<8x32xf32>
    %c0_53 = arith.constant 0 : index
    %c0_54 = arith.constant 0 : index
    %443 = vector.load %arg11[%c0_53, %c0_54] : memref<8x32xf32, #tpu.memory_space<vmem>>, vector<8x32xf32>
    tpu.vector_store %arg11[%c0_53, %c0_54], %442 {strides = array<i32>} : memref<8x32xf32, #tpu.memory_space<vmem>>, vector<8x32xf32>,
    %c0_i32_55 = arith.constant 0 : i32
    %444 = arith.cmpi eq, %arg2, %c0_i32_55 : i32
    %445 = arith.extui %444 : i1 to i32
    %c0_i32_56 = arith.constant 0 : i32
    %446 = arith.cmpi ne, %445, %c0_i32_56 : i32
    scf.if %446 {
      %c0_57 = arith.constant 0 : index
      %c0_58 = arith.constant 0 : index
      %447 = vector.load %arg13[%c0_57, %c0_58] : memref<8x4xf32, #tpu.memory_space<vmem>>, vector<8x4xf32>
      %448 = tpu.reciprocal %447 {approx = true} : vector<8x4xf32> -> vector<8x4xf32>
      %449 = vector.extract_strided_slice %448 {offsets = [0, 0], sizes = [8, 1], strides = [1, 1]} : vector<8x4xf32> to vector<8x1xf32>
      %450 = vector.shape_cast %449 : vector<8x1xf32> to vector<8x1xf32>
      %451 = vector.broadcast %450 : vector<8x1xf32> to vector<8x8xf32>
      %452 = vector.extract_strided_slice %448 {offsets = [0, 1], sizes = [8, 1], strides = [1, 1]} : vector<8x4xf32> to vector<8x1xf32>
      %453 = vector.shape_cast %452 : vector<8x1xf32> to vector<8x1xf32>
      %454 = vector.broadcast %453 : vector<8x1xf32> to vector<8x8xf32>
      %455 = vector.extract_strided_slice %448 {offsets = [0, 2], sizes = [8, 1], strides = [1, 1]} : vector<8x4xf32> to vector<8x1xf32>
      %456 = vector.shape_cast %455 : vector<8x1xf32> to vector<8x1xf32>
      %457 = vector.broadcast %456 : vector<8x1xf32> to vector<8x8xf32>
      %458 = vector.extract_strided_slice %448 {offsets = [0, 3], sizes = [8, 1], strides = [1, 1]} : vector<8x4xf32> to vector<8x1xf32>
      %459 = vector.shape_cast %458 : vector<8x1xf32> to vector<8x1xf32>
      %460 = vector.broadcast %459 : vector<8x1xf32> to vector<8x8xf32>
      %461 = tpu.concatenate %451, %454, %457, %460 in 1 : vector<8x8xf32>, vector<8x8xf32>, vector<8x8xf32>, vector<8x8xf32> -> vector<8x32xf32>
      %c0_59 = arith.constant 0 : index
      %c0_60 = arith.constant 0 : index
      %462 = vector.load %arg11[%c0_59, %c0_60] : memref<8x32xf32, #tpu.memory_space<vmem>>, vector<8x32xf32>
      %463 = arith.mulf %462, %461 : vector<8x32xf32>
      %464 = arith.truncf %463 : vector<8x32xf32> to vector<8x32xbf16>
      %c0_61 = arith.constant 0 : index
      %c0_62 = arith.constant 0 : index
      %c0_63 = arith.constant 0 : index
      %465 = vector.load %arg10[%c0_61, %c0_62, %c0_63] : memref<1x8x32xbf16, #tpu.memory_space<vmem>>, vector<1x8x32xbf16>
      %466 = vector.shape_cast %465 : vector<1x8x32xbf16> to vector<8x32xbf16>
      %467 = vector.shape_cast %464 : vector<8x32xbf16> to vector<1x8x32xbf16>
      tpu.vector_store %arg10[%c0_61, %c0_62, %c0_63], %467 {strides = array<i32>} : memref<1x8x32xbf16, #tpu.memory_space<vmem>>, vector<1x8x32xbf16>,
    } else {
    }
    return
  }
  func.func @transform_0(%arg0: i32, %arg1: i32, %arg2: i32) -> i32 {
    %c0_i32 = arith.constant 0 : i32
    %c0_i32_0 = arith.constant 0 : i32
    return %c0_i32 : i32
  }
  func.func @transform_1(%arg0: i32, %arg1: i32, %arg2: i32) -> (i32, i32) {
    %c0_i32 = arith.constant 0 : i32
    %c0_i32_0 = arith.constant 0 : i32
    %c0_i32_1 = arith.constant 0 : i32
    return %c0_i32, %c0_i32_0 : i32, i32
  }
  func.func @transform_2(%arg0: i32, %arg1: i32, %arg2: i32) -> (i32, i32) {
    %c0_i32 = arith.constant 0 : i32
    %c0_i32_0 = arith.constant 0 : i32
    %c0_i32_1 = arith.constant 0 : i32
    return %c0_i32, %c0_i32_0 : i32, i32
  }
  func.func @transform_3(%arg0: i32, %arg1: i32, %arg2: i32) -> (i32, i32, i32) {
    %c0_i32 = arith.constant 0 : i32
    %c0_i32_0 = arith.constant 0 : i32
    return %arg0, %arg1, %c0_i32 : i32, i32, i32
  }
  func.func @transform_4(%arg0: i32, %arg1: i32, %arg2: i32) -> (i32, i32, i32) {
    %c0_i32 = arith.constant 0 : i32
    %c0_i32_0 = arith.constant 0 : i32
    return %arg0, %c0_i32, %arg2 : i32, i32, i32
  }
  func.func @transform_5(%arg0: i32, %arg1: i32, %arg2: i32) -> (i32, i32, i32) {
    %c0_i32 = arith.constant 0 : i32
    %c0_i32_0 = arith.constant 0 : i32
    return %arg0, %arg2, %c0_i32 : i32, i32, i32
  }
  func.func @transform_6(%arg0: i32, %arg1: i32, %arg2: i32) -> (i32, i32, i32) {
    %c0_i32 = arith.constant 0 : i32
    return %arg0, %arg1, %arg2 : i32, i32, i32
  }
  func.func @transform_7(%arg0: i32, %arg1: i32, %arg2: i32) -> (i32, i32, i32) {
    %c0_i32 = arith.constant 0 : i32
    %c0_i32_0 = arith.constant 0 : i32
    return %arg0, %arg1, %c0_i32 : i32, i32, i32
  }
}

</mosaic_0001>

<llo_original>
// kernel: gatv3_forward.5
$region0: #{gatv3_forward.5}
  #allocation0 [shape = 'u32[]', space=smem, size = 0x4, offset = 0x4, fixed_abs, tag = 'smem constant byte address 0x4 - core index']
  #allocation1 [shape = 'u32[144,128]{1,0:T(1,128)}', space=vmem, size = 0x12000, scoped, tag = 'internal scratch']
  #allocation2 [shape = 'f32[16,32]{1,0:T(8,128)}', space=vmem, size = 0x2000, scoped, tag = 'scratch operand']
  %s0 = inlined_call_operand.vmem [shape: bf16[16,32], index: 0, kind: input, shape index: {}]
  %s1 = inlined_call_operand.vmem [shape: bf16[32,32], index: 1, kind: input, shape index: {}]
  %s2 = inlined_call_operand.hbm [shape: f32[16,32], index: 2, kind: output, shape index: {}]
  %s3 = sld [smem:[#allocation0]]
  $region26: #{gatv3_forward.5} parent=0
    _
  %s5 = ssub.s32 1, %s3
  %s6 = scalar_select 0, %s5, %s3
  $region1: #{gatv3_forward.5} parent=0
    #allocation3 [shape = 'u8[8192]{0}', space=vmem, size = 0x2000, scoped, tag = 'output window, operand 0, single buffered']
    #allocation4 [shape = 's32[1]{0}', space=sflag, size = 0x4, scoped, tag = 'scoped memory for gatv3_forward.5']
    %7 = vsyncpa [#allocation4], 0
    // Predicated region
    $region2: #{gatv3_forward.5} parent=1 // pred_check
      _
    $region3: #{gatv3_forward.5} parent=1 // pred_check_branch
      %9 = sbr.rel (0) target = $region5
    $region4: #{gatv3_forward.5} parent=1 // pred_region
      _
    $region5: #{gatv3_forward.5} parent=1 // pred_fallthru
      _
    // Predicated region
    $region6: #{gatv3_forward.5} parent=1 // pred_check
      _
    $region7: #{gatv3_forward.5} parent=1 // pred_check_branch
      %11 = sbr.rel (0) target = $region9
    $region8: #{gatv3_forward.5} parent=1 // pred_region
      _
    $region9: #{gatv3_forward.5} parent=1 // pred_fallthru
      _
    %p13 = scmp.eq.s32.totalorder 0, 0
    // Predicated region
    $region10: #{gatv3_forward.5} parent=1 // pred_check
      %p14 = pneg %p13
    $region11: #{gatv3_forward.5} parent=1 // pred_check_branch
      %16 = sbr.rel (%p14) target = $region13
    $region12: #{gatv3_forward.5} parent=1 // pred_region
      %vm17 = vcmask 261120
      %18 = vst.msk [vmem:[#allocation2] sm:$0xff] %vm17, 0.0
      %19 = vst.msk [vmem:[#allocation2 + $0x8] sm:$0xff] %vm17, 0.0
    $region13: #{gatv3_forward.5} parent=1 // pred_fallthru
      _
    %v20 = vld [vmem:[#allocation2] sm:$0xff]
    %v21 = vld [vmem:[#allocation2 + $0x8] sm:$0xff]
    %v22 = vld [vmem:[%s0] sm:$0xf]
    %v23 = vld [vmem:[%s0 + $0x4] sm:$0xf]
    %v24 = vld [vmem:[%s1] sm:$0xf]
    %v25 = vld [vmem:[%s1 + $0x4] sm:$0xf]
    %v26 = vld [vmem:[%s1 + $0x8] sm:$0xf]
    %v27 = vld [vmem:[%s1 + $0xc] sm:$0xf]
    %v30 = vunpack.c.l.b16 %v22
    %v31 = vunpack.c.l.b16 %v23
    %v32 = vpack.c.b16 %v31, %v30
    %v37 = vunpack.c.l.b16 %v24
    %v38 = vunpack.c.l.b16 %v25
    %v39 = vunpack.c.l.b16 %v26
    %v40 = vunpack.c.l.b16 %v27
    %v41 = vpack.c.b16 %v38, %v37
    %v42 = vpack.c.b16 %v40, %v39
    %vm45 = vcmask 261120
    %v47 = vsel %vm45, %v32, 0
    %49 = vmatprep.subr.bf16.mxu0 0
    %50 = vmatpush1.bf16.msra.mxu0 0
    %51 = vmatprep.subr.bf16.mxu0 0
    %52 = vmatpush1.bf16.msra.mxu0 0
    %53 = vmatprep.subr.bf16.mxu0 0
    %54 = vmatpush1.bf16.msra.mxu0 0
    %55 = vmatprep.subr.bf16.mxu0 0
    %56 = vmatpush1.bf16.msra.mxu0 0
    %57 = vmatprep.subr.bf16.mxu0 0
    %58 = vmatpush1.bf16.msra.mxu0 0
    %59 = vmatprep.subr.bf16.mxu0 0
    %60 = vmatpush1.bf16.msra.mxu0 0
    %61 = vmatprep.subr.bf16.mxu0 0
    %62 = vmatpush1.bf16.msra.mxu0 %v42
    %63 = vmatprep.subr.bf16.mxu0 0
    %64 = vmatpush1.bf16.msra.mxu0 %v41
    %65 = vmatprep.subr.bf16.mxu0 0
    %66 = vmatpush2.bf16.msra.mxu0 0
    %67 = vmatprep.subr.bf16.mxu0 0
    %68 = vmatpush2.bf16.msra.mxu0 0
    %69 = vmatprep.subr.bf16.mxu0 0
    %70 = vmatpush2.bf16.msra.mxu0 0
    %71 = vmatprep.subr.bf16.mxu0 0
    %72 = vmatpush2.bf16.msra.mxu0 0
    %73 = vmatprep.subr.bf16.mxu0 0
    %74 = vmatpush2.bf16.msra.mxu0 0
    %75 = vmatprep.subr.bf16.mxu0 0
    %76 = vmatpush2.bf16.msra.mxu0 0
    %77 = vmatprep.subr.bf16.mxu0 0
    %78 = vmatpush2.bf16.msra.mxu0 0
    %79 = vmatprep.subr.bf16.mxu0 0
    %80 = vmatpush2.bf16.msra.mxu0 0
    %81 = vmatprep.mubr.bf16.mxu0 0
    %82 = vmatmul.mubr.bf16.gmra.mxu0 %v47
    %v83 = vpop.f32.mrf.mxu0
    %v84 = vadd.f32 0.0, %v83
    %v85 = vpop.f32.mrf.mxu0
    %v86 = vpop.f32.mrf.mxu0
    %v87 = vadd.f32 0.0, %v86
    %v88 = vpop.f32.mrf.mxu0
    %89 = vdwg.mxu0
    %v90 = vadd.f32 %v20, %v84
    %v91 = vadd.f32 %v21, %v87
    %92 = vst.msk [vmem:[#allocation2] sm:$0xff] %vm45, %v90
    %93 = vst.msk [vmem:[#allocation2 + $0x8] sm:$0xff] %vm45, %v91
    // Predicated region
    $region14: #{gatv3_forward.5} parent=1 // pred_check
      %p94 = pneg %p13
    $region15: #{gatv3_forward.5} parent=1 // pred_check_branch
      %96 = sbr.rel (%p94) target = $region17
    $region16: #{gatv3_forward.5} parent=1 // pred_region
      %v97 = vld [vmem:[#allocation2] sm:$0xff]
      %v98 = vld [vmem:[#allocation2 + $0x8] sm:$0xff]
      %99 = vst.msk [vmem:[#allocation3] sm:$0xff] %vm45, %v97
      %100 = vst.msk [vmem:[#allocation3 + $0x8] sm:$0xff] %vm45, %v98
    $region17: #{gatv3_forward.5} parent=1 // pred_fallthru
      _
    // Predicated region
    $region18: #{gatv3_forward.5} parent=1 // pred_check
      _
    $region19: #{gatv3_forward.5} parent=1 // pred_check_branch
      %102 = sbr.rel (0) target = $region21
    $region20: #{gatv3_forward.5} parent=1 // pred_region
      %s104 = ssub.s32 256, 256
      %105 = vsyncadd [#allocation4], %s104
      %s106 = sshll.u32 [#allocation3], 4
      %s107 = int_to_ptr.vmem [resolvable:$true] %s106
      %112 = dma.vmem_to_hbm [thread:$0]  %s107, 256, %s2, [#allocation4], 128, 128, 8
    $region21: #{gatv3_forward.5} parent=1 // pred_fallthru
      _
    // Predicated region
    $region22: #{gatv3_forward.5} parent=1 // pred_check
      _
    $region23: #{gatv3_forward.5} parent=1 // pred_check_branch
      %114 = sbr.rel (0) target = $region25
    $region24: #{gatv3_forward.5} parent=1 // pred_region
      %115 = dma.done [#allocation4], 256
    $region25: #{gatv3_forward.5} parent=1 // pred_fallthru
      _
    %116 = vsyncpa [#allocation4], 1

// kernel: gatv3_forward.3
$region0: #{gatv3_forward.3}
  #allocation0 [shape = 'u32[]', space=smem, size = 0x4, offset = 0x4, fixed_abs, tag = 'smem constant byte address 0x4 - core index']
  #allocation1 [shape = 'u32[144,128]{1,0:T(1,128)}', space=vmem, size = 0x12000, scoped, tag = 'internal scratch']
  #allocation2 [shape = 'f32[16,96]{1,0:T(8,128)}', space=vmem, size = 0x2000, scoped, tag = 'scratch operand']
  %s0 = inlined_call_operand.vmem [shape: bf16[16,32], index: 0, kind: input, shape index: {}]
  %s1 = inlined_call_operand.vmem [shape: bf16[32,96], index: 1, kind: input, shape index: {}]
  %s2 = inlined_call_operand.vmem [shape: bf16[16,96], index: 2, kind: output, shape index: {}]
  %s3 = sld [smem:[#allocation0]]
  $region26: #{gatv3_forward.3} parent=0
    _
  %s5 = ssub.s32 1, %s3
  %s6 = scalar_select 0, %s5, %s3
  // Predicated region
  $region2: #{gatv3_forward.3} parent=0 // pred_check
    _
  $region3: #{gatv3_forward.3} parent=0 // pred_check_branch
    %8 = sbr.rel (0) target = $region5
  $region4: #{gatv3_forward.3} parent=0 // pred_region
    _
  $region5: #{gatv3_forward.3} parent=0 // pred_fallthru
    _
  // Predicated region
  $region6: #{gatv3_forward.3} parent=0 // pred_check
    _
  $region7: #{gatv3_forward.3} parent=0 // pred_check_branch
    %10 = sbr.rel (0) target = $region9
  $region8: #{gatv3_forward.3} parent=0 // pred_region
    _
  $region9: #{gatv3_forward.3} parent=0 // pred_fallthru
    _
  %p12 = scmp.eq.s32.totalorder 0, 0
  // Predicated region
  $region10: #{gatv3_forward.3} parent=0 // pred_check
    %p13 = pneg %p12
  $region11: #{gatv3_forward.3} parent=0 // pred_check_branch
    %15 = sbr.rel (%p13) target = $region13
  $region12: #{gatv3_forward.3} parent=0 // pred_region
    %vm16 = vcmask 785408
    %17 = vst.msk [vmem:[#allocation2] sm:$0xff] %vm16, 0.0
    %18 = vst.msk [vmem:[#allocation2 + $0x8] sm:$0xff] %vm16, 0.0
  $region13: #{gatv3_forward.3} parent=0 // pred_fallthru
    _
  %v19 = vld [vmem:[#allocation2] sm:$0xff]
  %v20 = vld [vmem:[#allocation2 + $0x8] sm:$0xff]
  %v21 = vld [vmem:[%s0] sm:$0xf]
  %v22 = vld [vmem:[%s0 + $0x4] sm:$0xf]
  %v23 = vld [vmem:[%s1] sm:$0xf]
  %v24 = vld [vmem:[%s1 + $0x4] sm:$0xf]
  %v25 = vld [vmem:[%s1 + $0x8] sm:$0xf]
  %v26 = vld [vmem:[%s1 + $0xc] sm:$0xf]
  %v29 = vunpack.c.l.b16 %v21
  %v30 = vunpack.c.l.b16 %v22
  %v31 = vpack.c.b16 %v30, %v29
  %v36 = vunpack.c.l.b16 %v23
  %v37 = vunpack.c.l.b16 %v24
  %v38 = vunpack.c.l.b16 %v25
  %v39 = vunpack.c.l.b16 %v26
  %v40 = vpack.c.b16 %v37, %v36
  %v41 = vpack.c.b16 %v39, %v38
  %vm44 = vcmask 261120
  %v46 = vsel %vm44, %v31, 0
  %48 = vmatprep.subr.bf16.mxu0 0
  %49 = vmatpush1.bf16.msra.mxu0 0
  %50 = vmatprep.subr.bf16.mxu0 0
  %51 = vmatpush1.bf16.msra.mxu0 0
  %52 = vmatprep.subr.bf16.mxu0 0
  %53 = vmatpush1.bf16.msra.mxu0 0
  %54 = vmatprep.subr.bf16.mxu0 0
  %55 = vmatpush1.bf16.msra.mxu0 0
  %56 = vmatprep.subr.bf16.mxu0 0
  %57 = vmatpush1.bf16.msra.mxu0 0
  %58 = vmatprep.subr.bf16.mxu0 0
  %59 = vmatpush1.bf16.msra.mxu0 0
  %60 = vmatprep.subr.bf16.mxu0 0
  %61 = vmatpush1.bf16.msra.mxu0 %v41
  %62 = vmatprep.subr.bf16.mxu0 0
  %63 = vmatpush1.bf16.msra.mxu0 %v40
  %64 = vmatprep.subr.bf16.mxu0 0
  %65 = vmatpush2.bf16.msra.mxu0 0
  %66 = vmatprep.subr.bf16.mxu0 0
  %67 = vmatpush2.bf16.msra.mxu0 0
  %68 = vmatprep.subr.bf16.mxu0 0
  %69 = vmatpush2.bf16.msra.mxu0 0
  %70 = vmatprep.subr.bf16.mxu0 0
  %71 = vmatpush2.bf16.msra.mxu0 0
  %72 = vmatprep.subr.bf16.mxu0 0
  %73 = vmatpush2.bf16.msra.mxu0 0
  %74 = vmatprep.subr.bf16.mxu0 0
  %75 = vmatpush2.bf16.msra.mxu0 0
  %76 = vmatprep.subr.bf16.mxu0 0
  %77 = vmatpush2.bf16.msra.mxu0 0
  %78 = vmatprep.subr.bf16.mxu0 0
  %79 = vmatpush2.bf16.msra.mxu0 0
  %80 = vmatprep.mubr.bf16.mxu0 0
  %81 = vmatmul.mubr.bf16.gmra.mxu0 %v46
  %v82 = vpop.f32.mrf.mxu0
  %v83 = vadd.f32 0.0, %v82
  %v84 = vpop.f32.mrf.mxu0
  %v85 = vpop.f32.mrf.mxu0
  %v86 = vadd.f32 0.0, %v85
  %v87 = vpop.f32.mrf.mxu0
  %88 = vdwg.mxu0
  %v89 = vadd.f32 %v19, %v83
  %v90 = vadd.f32 %v20, %v86
  %vm91 = vcmask 785408
  %92 = vst.msk [vmem:[#allocation2] sm:$0xff] %vm91, %v89
  %93 = vst.msk [vmem:[#allocation2 + $0x8] sm:$0xff] %vm91, %v90
  // Predicated region
  $region14: #{gatv3_forward.3} parent=0 // pred_check
    %p94 = pneg %p12
  $region15: #{gatv3_forward.3} parent=0 // pred_check_branch
    %96 = sbr.rel (%p94) target = $region17
  $region16: #{gatv3_forward.3} parent=0 // pred_region
    %v97 = vld [vmem:[#allocation2] sm:$0xff]
    %v98 = vld [vmem:[#allocation2 + $0x8] sm:$0xff]
    %v99 = vpack.c.bf16 %v98, %v97
    %v101 = vunpack.c.l.b16 %v99
    %v102 = vunpack.c.h.b16 %v99
    %v103 = vpack.c.b16 %v101, %v101
    %v104 = vpack.c.b16 %v102, %v102
    %vm107 = vcmask 781312
    %108 = vst.msk [vmem:[%s2] sm:$0xf] %vm107, %v103
    %109 = vst.msk [vmem:[%s2 + $0x4] sm:$0xf] %vm107, %v104
  $region17: #{gatv3_forward.3} parent=0 // pred_fallthru
    _
  // Predicated region
  $region18: #{gatv3_forward.3} parent=0 // pred_check
    _
  $region19: #{gatv3_forward.3} parent=0 // pred_check_branch
    %111 = sbr.rel (0) target = $region21
  $region20: #{gatv3_forward.3} parent=0 // pred_region
    _
  $region21: #{gatv3_forward.3} parent=0 // pred_fallthru
    _
  // Predicated region
  $region22: #{gatv3_forward.3} parent=0 // pred_check
    _
  $region23: #{gatv3_forward.3} parent=0 // pred_check_branch
    %113 = sbr.rel (0) target = $region25
  $region24: #{gatv3_forward.3} parent=0 // pred_region
    _
  $region25: #{gatv3_forward.3} parent=0 // pred_fallthru
    _

// kernel: gatv3_forward.4
$region0: #{gatv3_forward.4}
  #allocation0 [shape = 'u32[]', space=smem, size = 0x4, offset = 0x4, fixed_abs, tag = 'smem constant byte address 0x4 - core index']
  #allocation1 [shape = 'u32[144,128]{1,0:T(1,128)}', space=vmem, size = 0x12000, scoped, tag = 'internal scratch']
  #allocation2 [shape = 'f32[8,32]{1,0:T(8,128)}', space=vmem, size = 0x1000, scoped, tag = 'scratch operand']
  #allocation3 [shape = 'f32[8,4]{1,0:T(8,128)}', space=vmem, size = 0x1000, scoped, tag = 'scratch operand']
  #allocation4 [shape = 'f32[8,4]{1,0:T(8,128)}', space=vmem, size = 0x1000, scoped, tag = 'scratch operand']
  %s0 = inlined_call_operand.vmem [shape: f32[8], index: 0, kind: input, shape index: {}]
  %s1 = inlined_call_operand.vmem [shape: f32[32,4], index: 1, kind: input, shape index: {}]
  %s2 = inlined_call_operand.vmem [shape: f32[4,32], index: 2, kind: input, shape index: {}]
  %s3 = inlined_call_operand.vmem [shape: bf16[2,8,32], index: 3, kind: input, shape index: {}]
  %s4 = inlined_call_operand.vmem [shape: bf16[2,32,8], index: 4, kind: input, shape index: {}]
  %s5 = inlined_call_operand.vmem [shape: bf16[2,8,32], index: 5, kind: input, shape index: {}]
  %s6 = inlined_call_operand.vmem [shape: s8[2,8,8], index: 6, kind: input, shape index: {}]
  %s7 = inlined_call_operand.vmem [shape: bf16[2,8,32], index: 7, kind: output, shape index: {}]
  %s8 = sld [smem:[#allocation0]]
  $region73: #{gatv3_forward.4} parent=0
    _
  %s10 = ssub.s32 1, %s8
  %s11 = scalar_select 0, %s10, %s8
  $region1: #{gatv3_forward.4} parent=0
    #allocation5 [shape = 'u8[512]{0}', space=smem, size = 0x200, scoped, tag = 'input window, operand 0, single buffered']
    #allocation6 [shape = 's32[2]{0}', space=sflag, size = 0x8, scoped, tag = 'scoped memory for gatv3_forward.4']
    %12 = vsyncpa [#allocation6], 0
    loop: start=0, step=1, limit=4
    $region2: #{gatv3_forward.4} parent=1 // loop_pre_header
      _
    $region3: #{gatv3_forward.4} parent=1 // loop_header
      %s14 = sphi 0, %s18
      %p15 = scmp.ge.s32.totalorder %s14, 4
      %s21 = sphi 0, %s40
      %s22 = sphi 0, %s36
      %s23 = sphi 0, %s32
      %s24 = sphi 0, %s21
      %s25 = sphi 0, %s22
      %s26 = sphi 0, %s23
      %s27 = sphi 0, %s24
      %s28 = sphi 0, %s25
      %s29 = sphi 0, %s26
      %s41 = sphi 0, %s41
      %s43 = sphi 0, %s41
      %s44 = sphi 0, %s43
      %s58 = sphi 0, %s44
      %s62 = sphi 0, %s62
      %s64 = sphi 0, %s62
      %s65 = sphi 0, %s64
      %s79 = sphi 0, %s65
      %s83 = sphi 0, %s83
      %s85 = sphi 0, %s83
      %s86 = sphi 0, %s85
      %s100 = sphi 0, %s86
      %s108 = sphi 0, %s110
      %s111 = sphi 0, %s108
      %s112 = sphi 0, %s111
      %s128 = sphi 0, %s112
      %s136 = sphi 0, %s138
      %s139 = sphi 0, %s136
      %s140 = sphi 0, %s139
      %s156 = sphi 0, %s140
      %s164 = sphi 0, %s166
      %s167 = sphi 0, %s164
      %s168 = sphi 0, %s167
      %s184 = sphi 0, %s168
      %s194 = sphi 0, %s196
      %s197 = sphi 0, %s194
      %s198 = sphi 0, %s197
      %s214 = sphi 0, %s198
      %s222 = sphi 0, %s224
      %s225 = sphi 0, %s222
      %s226 = sphi 0, %s225
      %s242 = sphi 0, %s226
    $region4: #{gatv3_forward.4} parent=1 // loop_header_branch
      %17 = sbr.rel (%p15) target = $region8
    $region5: #{gatv3_forward.4} parent=1 // loop_body
      %s19 = ssub.s32 %s14, 1
      %s20 = ssub.s32 %s14, 2
      %s30 = sadd.s32 1, %s23
      %p31 = scmp.ge.s32.totalorder %s30, 1
      %s32 = scalar_select %p31, 0, %s30
      %s33 = sadd.s32 1, %s22
      %s34 = scalar_select %p31, %s33, %s22
      %p35 = scmp.ge.s32.totalorder %s34, 1
      %s36 = scalar_select %p35, 0, %s34
      %s37 = sadd.s32 1, %s21
      %s38 = scalar_select %p35, %s37, %s21
      %p39 = scmp.ge.s32.totalorder %s38, 2
      %s40 = scalar_select %p39, 0, %s38
      %s42 = sadd.s32 %s41, 1
      %p45 = scmp.eq.s32.totalorder %s14, 1
      %p46 = scmp.ne.s32.totalorder %s41, %s43
      %p47 = scmp.eq.s32.totalorder %s14, 0
      %p48 = por %p46, %p47
      %p49 = scmp.ne.s32.totalorder %s41, %s43
      %p50 = scmp.eq.s32.totalorder %s19, 1
      %p51 = por %p49, %p50
      %p52 = scmp.ne.s32.totalorder %s43, %s44
      %p53 = scmp.eq.s32.totalorder %s19, 0
      %p54 = por %p52, %p53
      %p55 = scmp.ne.s32.totalorder %s43, %s44
      %p56 = scmp.eq.s32.totalorder %s20, 1
      %p57 = por %p55, %p56
      %p59 = scmp.ne.s32.totalorder %s44, %s58
      %p60 = scmp.eq.s32.totalorder %s20, 0
      %p61 = por %p59, %p60
      %s63 = sadd.s32 %s62, 1
      %p66 = scmp.eq.s32.totalorder %s14, 1
      %p67 = scmp.ne.s32.totalorder %s62, %s64
      %p68 = scmp.eq.s32.totalorder %s14, 0
      %p69 = por %p67, %p68
      %p70 = scmp.ne.s32.totalorder %s62, %s64
      %p71 = scmp.eq.s32.totalorder %s19, 1
      %p72 = por %p70, %p71
      %p73 = scmp.ne.s32.totalorder %s64, %s65
      %p74 = scmp.eq.s32.totalorder %s19, 0
      %p75 = por %p73, %p74
      %p76 = scmp.ne.s32.totalorder %s64, %s65
      %p77 = scmp.eq.s32.totalorder %s20, 1
      %p78 = por %p76, %p77
      %p80 = scmp.ne.s32.totalorder %s65, %s79
      %p81 = scmp.eq.s32.totalorder %s20, 0
      %p82 = por %p80, %p81
      %s84 = sadd.s32 %s83, 1
      %p87 = scmp.eq.s32.totalorder %s14, 1
      %p88 = scmp.ne.s32.totalorder %s83, %s85
      %p89 = scmp.eq.s32.totalorder %s14, 0
      %p90 = por %p88, %p89
      %p91 = scmp.ne.s32.totalorder %s83, %s85
      %p92 = scmp.eq.s32.totalorder %s19, 1
      %p93 = por %p91, %p92
      %p94 = scmp.ne.s32.totalorder %s85, %s86
      %p95 = scmp.eq.s32.totalorder %s19, 0
      %p96 = por %p94, %p95
      %p97 = scmp.ne.s32.totalorder %s85, %s86
      %p98 = scmp.eq.s32.totalorder %s20, 1
      %p99 = por %p97, %p98
      %p101 = scmp.ne.s32.totalorder %s86, %s100
      %p102 = scmp.eq.s32.totalorder %s20, 0
      %p103 = por %p101, %p102
      %s104 = ssub.s32 %s21, %s40
      %s105 = ssub.s32 %s22, %s36
      %s106 = sor.u32 %s104, %s105
      %p107 = scmp.eq.s32.totalorder %s106, 0
      %s109 = sadd.s32 %s108, 1
      %s110 = scalar_select %p107, %s108, %s109
      %p113 = pneg %p107
      %p114 = scmp.eq.s32.totalorder %s14, 1
      %p115 = por %p113, %p114
      %p116 = scmp.ne.s32.totalorder %s108, %s111
      %p117 = scmp.eq.s32.totalorder %s14, 0
      %p118 = por %p116, %p117
      %p119 = scmp.ne.s32.totalorder %s108, %s111
      %p120 = scmp.eq.s32.totalorder %s19, 1
      %p121 = por %p119, %p120
      %p122 = scmp.ne.s32.totalorder %s111, %s112
      %p123 = scmp.eq.s32.totalorder %s19, 0
      %p124 = por %p122, %p123
      %p125 = scmp.ne.s32.totalorder %s111, %s112
      %p126 = scmp.eq.s32.totalorder %s20, 1
      %p127 = por %p125, %p126
      %p129 = scmp.ne.s32.totalorder %s112, %s128
      %p130 = scmp.eq.s32.totalorder %s20, 0
      %p131 = por %p129, %p130
      %s132 = ssub.s32 %s21, %s40
      %s133 = ssub.s32 %s23, %s32
      %s134 = sor.u32 %s132, %s133
      %p135 = scmp.eq.s32.totalorder %s134, 0
      %s137 = sadd.s32 %s136, 1
      %s138 = scalar_select %p135, %s136, %s137
      %p141 = pneg %p135
      %p142 = scmp.eq.s32.totalorder %s14, 1
      %p143 = por %p141, %p142
      %p144 = scmp.ne.s32.totalorder %s136, %s139
      %p145 = scmp.eq.s32.totalorder %s14, 0
      %p146 = por %p144, %p145
      %p147 = scmp.ne.s32.totalorder %s136, %s139
      %p148 = scmp.eq.s32.totalorder %s19, 1
      %p149 = por %p147, %p148
      %p150 = scmp.ne.s32.totalorder %s139, %s140
      %p151 = scmp.eq.s32.totalorder %s19, 0
      %p152 = por %p150, %p151
      %p153 = scmp.ne.s32.totalorder %s139, %s140
      %p154 = scmp.eq.s32.totalorder %s20, 1
      %p155 = por %p153, %p154
      %p157 = scmp.ne.s32.totalorder %s140, %s156
      %p158 = scmp.eq.s32.totalorder %s20, 0
      %p159 = por %p157, %p158
      %s160 = ssub.s32 %s21, %s40
      %s161 = ssub.s32 %s23, %s32
      %s162 = sor.u32 %s160, %s161
      %p163 = scmp.eq.s32.totalorder %s162, 0
      %s165 = sadd.s32 %s164, 1
      %s166 = scalar_select %p163, %s164, %s165
      %p169 = pneg %p163
      %p170 = scmp.eq.s32.totalorder %s14, 1
      %p171 = por %p169, %p170
      %p172 = scmp.ne.s32.totalorder %s164, %s167
      %p173 = scmp.eq.s32.totalorder %s14, 0
      %p174 = por %p172, %p173
      %p175 = scmp.ne.s32.totalorder %s164, %s167
      %p176 = scmp.eq.s32.totalorder %s19, 1
      %p177 = por %p175, %p176
      %p178 = scmp.ne.s32.totalorder %s167, %s168
      %p179 = scmp.eq.s32.totalorder %s19, 0
      %p180 = por %p178, %p179
      %p181 = scmp.ne.s32.totalorder %s167, %s168
      %p182 = scmp.eq.s32.totalorder %s20, 1
      %p183 = por %p181, %p182
      %p185 = scmp.ne.s32.totalorder %s168, %s184
      %p186 = scmp.eq.s32.totalorder %s20, 0
      %p187 = por %p185, %p186
      %s188 = ssub.s32 %s21, %s40
      %s189 = ssub.s32 %s22, %s36
      %s190 = sor.u32 %s188, %s189
      %s191 = ssub.s32 %s23, %s32
      %s192 = sor.u32 %s190, %s191
      %p193 = scmp.eq.s32.totalorder %s192, 0
      %s195 = sadd.s32 %s194, 1
      %s196 = scalar_select %p193, %s194, %s195
      %p199 = pneg %p193
      %p200 = scmp.eq.s32.totalorder %s14, 1
      %p201 = por %p199, %p200
      %p202 = scmp.ne.s32.totalorder %s194, %s197
      %p203 = scmp.eq.s32.totalorder %s14, 0
      %p204 = por %p202, %p203
      %p205 = scmp.ne.s32.totalorder %s194, %s197
      %p206 = scmp.eq.s32.totalorder %s19, 1
      %p207 = por %p205, %p206
      %p208 = scmp.ne.s32.totalorder %s197, %s198
      %p209 = scmp.eq.s32.totalorder %s19, 0
      %p210 = por %p208, %p209
      %p211 = scmp.ne.s32.totalorder %s197, %s198
      %p212 = scmp.eq.s32.totalorder %s20, 1
      %p213 = por %p211, %p212
      %p215 = scmp.ne.s32.totalorder %s198, %s214
      %p216 = scmp.eq.s32.totalorder %s20, 0
      %p217 = por %p215, %p216
      %s218 = ssub.s32 %s21, %s40
      %s219 = ssub.s32 %s22, %s36
      %s220 = sor.u32 %s218, %s219
      %p221 = scmp.eq.s32.totalorder %s220, 0
      %s223 = sadd.s32 %s222, 1
      %s224 = scalar_select %p221, %s222, %s223
      %p227 = pneg %p221
      %p228 = scmp.eq.s32.totalorder %s14, 1
      %p229 = por %p227, %p228
      %p230 = scmp.ne.s32.totalorder %s222, %s225
      %p231 = scmp.eq.s32.totalorder %s14, 0
      %p232 = por %p230, %p231
      %p233 = scmp.ne.s32.totalorder %s222, %s225
      %p234 = scmp.eq.s32.totalorder %s19, 1
      %p235 = por %p233, %p234
      %p236 = scmp.ne.s32.totalorder %s225, %s226
      %p237 = scmp.eq.s32.totalorder %s19, 0
      %p238 = por %p236, %p237
      %p239 = scmp.ne.s32.totalorder %s225, %s226
      %p240 = scmp.eq.s32.totalorder %s20, 1
      %p241 = por %p239, %p240
      %p243 = scmp.ne.s32.totalorder %s226, %s242
      %p244 = scmp.eq.s32.totalorder %s20, 0
      %p245 = por %p243, %p244
      %p246 = scmp.le.s32.totalorder 1, %s14
      %p247 = scmp.lt.s32.totalorder %s14, 3
      %p248 = pnand %p246, %p247
      %p249 = pneg %p248
      // Predicated region
      $region9: #{gatv3_forward.4} parent=5 // pred_check
        _
      $region10: #{gatv3_forward.4} parent=5 // pred_check_branch
        %251 = sbr.rel (%p248) target = $region12
      $region11: #{gatv3_forward.4} parent=5 // pred_region
        %s252 = ssub.s32 %s14, 1
        // Predicated region
        $region13: #{gatv3_forward.4} parent=11 // pred_check
          %p253 = pneg %p54
        $region14: #{gatv3_forward.4} parent=11 // pred_check_branch
          %255 = sbr.rel (%p253) target = $region16
        $region15: #{gatv3_forward.4} parent=11 // pred_region
          %s257 = ssub.s32 16, 16
          %258 = vsyncadd [#allocation6], %s257
          %s260 = sshll.u32 %s0, 4
          %s261 = int_to_ptr.vmem [resolvable:$true] %s260
          %263 = dma.vmem_to_smem %s261, 16, [#allocation5], [#allocation6]
        $region16: #{gatv3_forward.4} parent=11 // pred_fallthru
          _
        // Predicated region
        $region17: #{gatv3_forward.4} parent=11 // pred_check
          %p264 = pneg %p75
        $region18: #{gatv3_forward.4} parent=11 // pred_check_branch
          %266 = sbr.rel (%p264) target = $region20
        $region19: #{gatv3_forward.4} parent=11 // pred_region
          _
        $region20: #{gatv3_forward.4} parent=11 // pred_fallthru
          _
        // Predicated region
        $region21: #{gatv3_forward.4} parent=11 // pred_check
          %p267 = pneg %p96
        $region22: #{gatv3_forward.4} parent=11 // pred_check_branch
          %269 = sbr.rel (%p267) target = $region24
        $region23: #{gatv3_forward.4} parent=11 // pred_region
          _
        $region24: #{gatv3_forward.4} parent=11 // pred_fallthru
          _
      $region12: #{gatv3_forward.4} parent=5 // pred_fallthru
        _
      %p270 = scmp.lt.s32.totalorder %s14, 2
      // Predicated region
      $region25: #{gatv3_forward.4} parent=5 // pred_check
        %p271 = pneg %p270
      $region26: #{gatv3_forward.4} parent=5 // pred_check_branch
        %273 = sbr.rel (%p271) target = $region28
      $region27: #{gatv3_forward.4} parent=5 // pred_region
        // Predicated region
        $region29: #{gatv3_forward.4} parent=27 // pred_check
          %p274 = pneg %p118
        $region30: #{gatv3_forward.4} parent=27 // pred_check_branch
          %276 = sbr.rel (%p274) target = $region32
        $region31: #{gatv3_forward.4} parent=27 // pred_region
          %p277 = scmp.lt.s32.totalorder %s21, 1
          %s278 = scalar_select %p277, %s21, 1
          %p279 = scmp.lt.s32.totalorder %s22, 0
          %s280 = scalar_select %p279, %s22, 0
          %s281 = sadd.s32 %s280, %s278
          %s282 = smul.addr %s281, 4
          %s283 = scalar_lea.vmem %s3, %s282
        $region32: #{gatv3_forward.4} parent=27 // pred_fallthru
          _
        // Predicated region
        $region33: #{gatv3_forward.4} parent=27 // pred_check
          %p284 = pneg %p146
        $region34: #{gatv3_forward.4} parent=27 // pred_check_branch
          %286 = sbr.rel (%p284) target = $region36
        $region35: #{gatv3_forward.4} parent=27 // pred_region
          %p287 = scmp.lt.s32.totalorder %s21, 1
          %s288 = scalar_select %p287, %s21, 1
          %p289 = scmp.lt.s32.totalorder %s23, 0
          %s290 = scalar_select %p289, %s23, 0
          %s291 = smul.addr %s288, 4
          %s292 = sadd.s32 %s290, %s291
          %s293 = smul.addr %s292, 4
          %s294 = scalar_lea.vmem %s4, %s293
        $region36: #{gatv3_forward.4} parent=27 // pred_fallthru
          _
        // Predicated region
        $region37: #{gatv3_forward.4} parent=27 // pred_check
          %p295 = pneg %p174
        $region38: #{gatv3_forward.4} parent=27 // pred_check_branch
          %297 = sbr.rel (%p295) target = $region40
        $region39: #{gatv3_forward.4} parent=27 // pred_region
          %p298 = scmp.lt.s32.totalorder %s21, 1
          %s299 = scalar_select %p298, %s21, 1
          %p300 = scmp.lt.s32.totalorder %s23, 0
          %s301 = scalar_select %p300, %s23, 0
          %s302 = sadd.s32 %s301, %s299
          %s303 = smul.addr %s302, 4
          %s304 = scalar_lea.vmem %s5, %s303
        $region40: #{gatv3_forward.4} parent=27 // pred_fallthru
          _
        // Predicated region
        $region41: #{gatv3_forward.4} parent=27 // pred_check
          %p305 = pneg %p204
        $region42: #{gatv3_forward.4} parent=27 // pred_check_branch
          %307 = sbr.rel (%p305) target = $region44
        $region43: #{gatv3_forward.4} parent=27 // pred_region
          %p308 = scmp.lt.s32.totalorder %s21, 1
          %s309 = scalar_select %p308, %s21, 1
          %p310 = scmp.lt.s32.totalorder %s22, 0
          %s311 = scalar_select %p310, %s22, 0
          %p312 = scmp.lt.s32.totalorder %s23, 0
          %s313 = scalar_select %p312, %s23, 0
          %s314 = sadd.s32 %s313, %s311
          %s315 = sadd.s32 %s314, %s309
          %s316 = smul.addr %s315, 2
          %s317 = scalar_lea.vmem %s6, %s316
        $region44: #{gatv3_forward.4} parent=27 // pred_fallthru
          _
      $region28: #{gatv3_forward.4} parent=5 // pred_fallthru
        _
      %p318 = scmp.le.s32.totalorder 1, %s14
      %p319 = scmp.lt.s32.totalorder %s14, 3
      %p320 = pnand %p318, %p319
      %p321 = pneg %p320
      // Predicated region
      $region45: #{gatv3_forward.4} parent=5 // pred_check
        _
      $region46: #{gatv3_forward.4} parent=5 // pred_check_branch
        %323 = sbr.rel (%p320) target = $region48
      $region47: #{gatv3_forward.4} parent=5 // pred_region
        %s324 = ssub.s32 %s14, 1
        // Predicated region
        $region49: #{gatv3_forward.4} parent=47 // pred_check
          %p325 = pneg %p54
        $region50: #{gatv3_forward.4} parent=47 // pred_check_branch
          %327 = sbr.rel (%p325) target = $region52
        $region51: #{gatv3_forward.4} parent=47 // pred_region
          %328 = dma.done [#allocation6], 16
        $region52: #{gatv3_forward.4} parent=47 // pred_fallthru
          _
        %329 = sfence
        %p330 = pneg %p54
        %p331 = pneg %p51
        %p332 = pneg %p75
        %p333 = pneg %p72
        %p334 = pneg %p96
        %p335 = pneg %p93
        %p336 = scmp.lt.s32.totalorder %s24, 1
        %s337 = scalar_select %p336, %s24, 1
        %p338 = scmp.lt.s32.totalorder %s25, 0
        %s339 = scalar_select %p338, %s25, 0
        %s340 = sadd.s32 %s339, %s337
        %s341 = smul.addr %s340, 4
        %s342 = scalar_lea.vmem %s3, %s341
        %p343 = pneg %p124
        %p344 = pneg %p121
        %p345 = scmp.lt.s32.totalorder %s24, 1
        %s346 = scalar_select %p345, %s24, 1
        %p347 = scmp.lt.s32.totalorder %s26, 0
        %s348 = scalar_select %p347, %s26, 0
        %s349 = smul.addr %s346, 4
        %s350 = sadd.s32 %s348, %s349
        %s351 = smul.addr %s350, 4
        %s352 = scalar_lea.vmem %s4, %s351
        %p353 = pneg %p152
        %p354 = pneg %p149
        %p355 = scmp.lt.s32.totalorder %s24, 1
        %s356 = scalar_select %p355, %s24, 1
        %p357 = scmp.lt.s32.totalorder %s26, 0
        %s358 = scalar_select %p357, %s26, 0
        %s359 = sadd.s32 %s358, %s356
        %s360 = smul.addr %s359, 4
        %s361 = scalar_lea.vmem %s5, %s360
        %p362 = pneg %p180
        %p363 = pneg %p177
        %p364 = scmp.lt.s32.totalorder %s24, 1
        %s365 = scalar_select %p364, %s24, 1
        %p366 = scmp.lt.s32.totalorder %s25, 0
        %s367 = scalar_select %p366, %s25, 0
        %p368 = scmp.lt.s32.totalorder %s26, 0
        %s369 = scalar_select %p368, %s26, 0
        %s370 = sadd.s32 %s369, %s367
        %s371 = sadd.s32 %s370, %s365
        %s372 = smul.addr %s371, 2
        %s373 = scalar_lea.vmem %s6, %s372
        %p374 = pneg %p210
        %p375 = pneg %p207
        %p376 = pneg %p238
        %p377 = pneg %p235
        %p378 = scmp.lt.s32.totalorder %s24, 1
        %s379 = scalar_select %p378, %s24, 1
        %p380 = scmp.lt.s32.totalorder %s25, 0
        %s381 = scalar_select %p380, %s25, 0
        %s382 = sadd.s32 %s381, %s379
        %s383 = smul.addr %s382, 4
        %s384 = scalar_lea.vmem %s7, %s383
        %p385 = scmp.lt.s32.totalorder %s24, 1
        %s386 = scalar_select %p385, %s24, 1
        %p387 = scmp.lt.s32.totalorder %s25, 0
        %s388 = scalar_select %p387, %s25, 0
        %s389 = sadd.s32 %s388, %s386
        %s390 = smul.addr %s389, 4
        %s391 = scalar_lea.vmem %s3, %s390
        %p392 = scmp.lt.s32.totalorder %s24, 1
        %s393 = scalar_select %p392, %s24, 1
        %p394 = scmp.lt.s32.totalorder %s26, 0
        %s395 = scalar_select %p394, %s26, 0
        %s396 = smul.addr %s393, 4
        %s397 = sadd.s32 %s395, %s396
        %s398 = smul.addr %s397, 4
        %s399 = scalar_lea.vmem %s4, %s398
        %p400 = scmp.lt.s32.totalorder %s24, 1
        %s401 = scalar_select %p400, %s24, 1
        %p402 = scmp.lt.s32.totalorder %s26, 0
        %s403 = scalar_select %p402, %s26, 0
        %s404 = sadd.s32 %s403, %s401
        %s405 = smul.addr %s404, 4
        %s406 = scalar_lea.vmem %s5, %s405
        %p407 = scmp.lt.s32.totalorder %s24, 1
        %s408 = scalar_select %p407, %s24, 1
        %p409 = scmp.lt.s32.totalorder %s25, 0
        %s410 = scalar_select %p409, %s25, 0
        %p411 = scmp.lt.s32.totalorder %s26, 0
        %s412 = scalar_select %p411, %s26, 0
        %s413 = sadd.s32 %s412, %s410
        %s414 = sadd.s32 %s413, %s408
        %s415 = smul.addr %s414, 2
        %s416 = scalar_lea.vmem %s6, %s415
        %p417 = scmp.lt.s32.totalorder %s24, 1
        %s418 = scalar_select %p417, %s24, 1
        %p419 = scmp.lt.s32.totalorder %s25, 0
        %s420 = scalar_select %p419, %s25, 0
        %s421 = sadd.s32 %s420, %s418
        %s422 = smul.addr %s421, 4
        %s423 = scalar_lea.vmem %s7, %s422
        %p425 = scmp.eq.s32.totalorder %s26, 0
        // Predicated region
        $region53: #{gatv3_forward.4} parent=47 // pred_check
          %p426 = pneg %p425
        $region54: #{gatv3_forward.4} parent=47 // pred_check_branch
          %428 = sbr.rel (%p426) target = $region56
        $region55: #{gatv3_forward.4} parent=47 // pred_region
          %vm429 = vcmask 31744
          %430 = vst.msk [vmem:[#allocation3] sm:$0xff] %vm429, -inf
          %431 = vst.msk [vmem:[#allocation4] sm:$0xff] %vm429, 0.0
          %vm432 = vcmask 261120
          %433 = vst.msk [vmem:[#allocation2] sm:$0xff] %vm432, 0.0
        $region56: #{gatv3_forward.4} parent=47 // pred_fallthru
          _
        %v434 = vld [vmem:[%s391] sm:$0xf]
        %v435 = vunpack.c.l.bf16 %v434
        %v436 = vld [vmem:[%s399] sm:$0xf]
        %v437 = vld [vmem:[%s399 + $0x4] sm:$0xf]
        %v438 = vld [vmem:[%s399 + $0x8] sm:$0xf]
        %v439 = vld [vmem:[%s399 + $0xc] sm:$0xf]
        %v440 = vunpack.c.l.bf16 %v436
        %v441 = vunpack.c.l.bf16 %v437
        %v442 = vunpack.c.l.bf16 %v438
        %v443 = vunpack.c.l.bf16 %v439
        %v444 = vld [vmem:[%s406] sm:$0xf]
        %v445 = vld [vmem:[%s416] sm:$0x3]
        %v446 = vunpack.c.0.s8 %v445
        %v447 = vcvt.s32.f32 %v446
        %v448 = vmul.f32 %v447, -1e+30
        %v449 = vld [vmem:[%s1] sm:$0xff]
        %v450 = vld [vmem:[%s1 + $0x8] sm:$0xff]
        %v451 = vld [vmem:[%s1 + $0x10] sm:$0xff]
        %v452 = vld [vmem:[%s1 + $0x18] sm:$0xff]
        %vm453 = vcmask 261120
        %v455 = vsel %vm453, %v435, 0
        %457 = vmatprep.subr.mxu0 0.0
        %458 = vmatpush1.msra.mxu0 0.0
        %459 = vmatprep.subr.mxu0 0.0
        %460 = vmatpush1.msra.mxu0 0.0
        %461 = vmatprep.subr.mxu0 0.0
        %462 = vmatpush1.msra.mxu0 0.0
        %463 = vmatprep.subr.mxu0 0.0
        %464 = vmatpush1.msra.mxu0 0.0
        %465 = vmatprep.subr.mxu0 0.0
        %466 = vmatpush1.msra.mxu0 0.0
        %467 = vmatprep.subr.mxu0 0.0
        %468 = vmatpush1.msra.mxu0 0.0
        %469 = vmatprep.subr.mxu0 0.0
        %470 = vmatpush1.msra.mxu0 0.0
        %471 = vmatprep.subr.mxu0 0.0
        %472 = vmatpush1.msra.mxu0 0.0
        %473 = vmatprep.subr.mxu0 0.0
        %474 = vmatpush1.msra.mxu0 0.0
        %475 = vmatprep.subr.mxu0 0.0
        %476 = vmatpush1.msra.mxu0 0.0
        %477 = vmatprep.subr.mxu0 0.0
        %478 = vmatpush1.msra.mxu0 0.0
        %479 = vmatprep.subr.mxu0 0.0
        %480 = vmatpush1.msra.mxu0 0.0
        %481 = vmatprep.subr.mxu0 0.0
        %482 = vmatpush1.msra.mxu0 %v452
        %483 = vmatprep.subr.mxu0 0.0
        %484 = vmatpush1.msra.mxu0 %v451
        %485 = vmatprep.subr.mxu0 0.0
        %486 = vmatpush1.msra.mxu0 %v450
        %487 = vmatprep.subr.mxu0 0.0
        %488 = vmatpush1.msra.mxu0 %v449
        %489 = vmatprep.subr.mxu0 0.0
        %490 = vmatpush2.msra.mxu0 0.0
        %491 = vmatprep.subr.mxu0 0.0
        %492 = vmatpush2.msra.mxu0 0.0
        %493 = vmatprep.subr.mxu0 0.0
        %494 = vmatpush2.msra.mxu0 0.0
        %495 = vmatprep.subr.mxu0 0.0
        %496 = vmatpush2.msra.mxu0 0.0
        %497 = vmatprep.subr.mxu0 0.0
        %498 = vmatpush2.msra.mxu0 0.0
        %499 = vmatprep.subr.mxu0 0.0
        %500 = vmatpush2.msra.mxu0 0.0
        %501 = vmatprep.subr.mxu0 0.0
        %502 = vmatpush2.msra.mxu0 0.0
        %503 = vmatprep.subr.mxu0 0.0
        %504 = vmatpush2.msra.mxu0 0.0
        %505 = vmatprep.subr.mxu0 0.0
        %506 = vmatpush2.msra.mxu0 0.0
        %507 = vmatprep.subr.mxu0 0.0
        %508 = vmatpush2.msra.mxu0 0.0
        %509 = vmatprep.subr.mxu0 0.0
        %510 = vmatpush2.msra.mxu0 0.0
        %511 = vmatprep.subr.mxu0 0.0
        %512 = vmatpush2.msra.mxu0 0.0
        %513 = vmatprep.subr.mxu0 0.0
        %514 = vmatpush2.msra.mxu0 0.0
        %515 = vmatprep.subr.mxu0 0.0
        %516 = vmatpush2.msra.mxu0 0.0
        %517 = vmatprep.subr.mxu0 0.0
        %518 = vmatpush2.msra.mxu0 0.0
        %519 = vmatprep.subr.mxu0 0.0
        %520 = vmatpush2.msra.mxu0 0.0
        %521 = vmatprep.mubr.f32.mxu0 0.0
        %522 = vmatmul.mubr.f32.gmra.mxu0 %v455
        %v523 = vpop.f32.mrf.mxu0
        %v524 = vadd.f32 0.0, %v523
        %v525 = vpop.f32.mrf.mxu0
        %526 = vdwg.mxu0
        %v527 = vld [vmem:[%s2] sm:$0xf]
        %v529 = vsel %vm453, %v527, 0
        %531 = vmatprep.subr.mxu0 0.0
        %532 = vmatpush1.msra.mxu0 0.0
        %533 = vmatprep.subr.mxu0 0.0
        %534 = vmatpush1.msra.mxu0 0.0
        %535 = vmatprep.subr.mxu0 0.0
        %536 = vmatpush1.msra.mxu0 0.0
        %537 = vmatprep.subr.mxu0 0.0
        %538 = vmatpush1.msra.mxu0 0.0
        %539 = vmatprep.subr.mxu0 0.0
        %540 = vmatpush1.msra.mxu0 0.0
        %541 = vmatprep.subr.mxu0 0.0
        %542 = vmatpush1.msra.mxu0 0.0
        %543 = vmatprep.subr.mxu0 0.0
        %544 = vmatpush1.msra.mxu0 0.0
        %545 = vmatprep.subr.mxu0 0.0
        %546 = vmatpush1.msra.mxu0 0.0
        %547 = vmatprep.subr.mxu0 0.0
        %548 = vmatpush1.msra.mxu0 0.0
        %549 = vmatprep.subr.mxu0 0.0
        %550 = vmatpush1.msra.mxu0 0.0
        %551 = vmatprep.subr.mxu0 0.0
        %552 = vmatpush1.msra.mxu0 0.0
        %553 = vmatprep.subr.mxu0 0.0
        %554 = vmatpush1.msra.mxu0 0.0
        %555 = vmatprep.subr.mxu0 0.0
        %556 = vmatpush1.msra.mxu0 %v443
        %557 = vmatprep.subr.mxu0 0.0
        %558 = vmatpush1.msra.mxu0 %v442
        %559 = vmatprep.subr.mxu0 0.0
        %560 = vmatpush1.msra.mxu0 %v441
        %561 = vmatprep.subr.mxu0 0.0
        %562 = vmatpush1.msra.mxu0 %v440
        %563 = vmatprep.subr.mxu0 0.0
        %564 = vmatpush2.msra.mxu0 0.0
        %565 = vmatprep.subr.mxu0 0.0
        %566 = vmatpush2.msra.mxu0 0.0
        %567 = vmatprep.subr.mxu0 0.0
        %568 = vmatpush2.msra.mxu0 0.0
        %569 = vmatprep.subr.mxu0 0.0
        %570 = vmatpush2.msra.mxu0 0.0
        %571 = vmatprep.subr.mxu0 0.0
        %572 = vmatpush2.msra.mxu0 0.0
        %573 = vmatprep.subr.mxu0 0.0
        %574 = vmatpush2.msra.mxu0 0.0
        %575 = vmatprep.subr.mxu0 0.0
        %576 = vmatpush2.msra.mxu0 0.0
        %577 = vmatprep.subr.mxu0 0.0
        %578 = vmatpush2.msra.mxu0 0.0
        %579 = vmatprep.subr.mxu0 0.0
        %580 = vmatpush2.msra.mxu0 0.0
        %581 = vmatprep.subr.mxu0 0.0
        %582 = vmatpush2.msra.mxu0 0.0
        %583 = vmatprep.subr.mxu0 0.0
        %584 = vmatpush2.msra.mxu0 0.0
        %585 = vmatprep.subr.mxu0 0.0
        %586 = vmatpush2.msra.mxu0 0.0
        %587 = vmatprep.subr.mxu0 0.0
        %588 = vmatpush2.msra.mxu0 0.0
        %589 = vmatprep.subr.mxu0 0.0
        %590 = vmatpush2.msra.mxu0 0.0
        %591 = vmatprep.subr.mxu0 0.0
        %592 = vmatpush2.msra.mxu0 0.0
        %593 = vmatprep.subr.mxu0 0.0
        %594 = vmatpush2.msra.mxu0 0.0
        %595 = vmatprep.mubr.f32.mxu0 0.0
        %596 = vmatmul.mubr.f32.gmra.mxu0 %v529
        %v597 = vpop.f32.mrf.mxu0
        %v598 = vadd.f32 0.0, %v597
        %v599 = vpop.f32.mrf.mxu0
        %600 = vdwg.mxu0
        %s601 = sld [smem:[#allocation5]]
        %s602 = smul.f32 %s601, 0.45
        %s603 = sld [smem:[#allocation5 + $0x1]]
        %s604 = smul.f32 %s603, 0.45
        %s605 = sld [smem:[#allocation5 + $0x2]]
        %s606 = smul.f32 %s605, 0.45
        %s607 = sld [smem:[#allocation5 + $0x3]]
        %s608 = smul.f32 %s607, 0.45
        %s609 = sld [smem:[#allocation5 + $0x4]]
        %s610 = smul.f32 %s609, 0.45
        %s611 = sld [smem:[#allocation5 + $0x5]]
        %s612 = smul.f32 %s611, 0.45
        %s613 = sld [smem:[#allocation5 + $0x6]]
        %s614 = smul.f32 %s613, 0.45
        %s615 = sld [smem:[#allocation5 + $0x7]]
        %s616 = smul.f32 %s615, 0.45
        %v617 = vld [vmem:[#allocation3] sm:$0xff]
        %v618 = vld [vmem:[#allocation4] sm:$0xff]
        %620 = vset.pattern.permute.xlu0 0
        %621 = vperm.xlu0 %620, %v524
        %v622 = vpop.permute.xlu0 %621
        %v624 = vlaneseq
        %v625 = vshrl.u32 %v624, 7
        %v626 = vsub.s32 0, %v625
        %v627 = vrot.slane %v598, %v626
        %v628 = vadd.f32 %v622, %v627
        %v629 = vmul.f32 %v628, 0.55
        %v630 = vadd.f32 %v448, %v629
        %631 = vset.pattern.permute.xlu0 0
        %632 = vperm.xlu0 %631, %v435
        %v633 = vpop.permute.xlu0 %632
        %v635 = vlaneseq
        %v636 = vshrl.u32 %v635, 7
        %v637 = vsub.s32 0, %v636
        %v638 = vrot.slane %v440, %v637
        %v639 = vadd.f32 %v633, %v638
        %v640 = vand.u32 2147483647, %v639
        %v641 = vstv %s602
        %v642 = vmul.f32 %v641, %v640
        %643 = vset.pattern.permute.xlu0 1
        %644 = vperm.xlu0 %643, %v435
        %v645 = vpop.permute.xlu0 %644
        %v647 = vlaneseq
        %v648 = vshrl.u32 %v647, 7
        %v649 = vsub.s32 1, %v648
        %v650 = vrot.slane %v440, %v649
        %v651 = vadd.f32 %v645, %v650
        %v652 = vand.u32 2147483647, %v651
        %v653 = vstv %s604
        %v654 = vmul.f32 %v653, %v652
        %v655 = vadd.f32 %v642, %v654
        %656 = vset.pattern.permute.xlu0 2
        %657 = vperm.xlu0 %656, %v435
        %v658 = vpop.permute.xlu0 %657
        %v660 = vlaneseq
        %v661 = vshrl.u32 %v660, 7
        %v662 = vsub.s32 2, %v661
        %v663 = vrot.slane %v440, %v662
        %v664 = vadd.f32 %v658, %v663
        %v665 = vand.u32 2147483647, %v664
        %v666 = vstv %s606
        %v667 = vmul.f32 %v666, %v665
        %v668 = vadd.f32 %v655, %v667
        %669 = vset.pattern.permute.xlu0 3
        %670 = vperm.xlu0 %669, %v435
        %v671 = vpop.permute.xlu0 %670
        %v673 = vlaneseq
        %v674 = vshrl.u32 %v673, 7
        %v675 = vsub.s32 3, %v674
        %v676 = vrot.slane %v440, %v675
        %v677 = vadd.f32 %v671, %v676
        %v678 = vand.u32 2147483647, %v677
        %v679 = vstv %s608
        %v680 = vmul.f32 %v679, %v678
        %v681 = vadd.f32 %v668, %v680
        %v682 = vadd.f32 %v630, %v681
        %683 = vset.pattern.permute.xlu0 4
        %684 = vperm.xlu0 %683, %v435
        %v685 = vpop.permute.xlu0 %684
        %v687 = vlaneseq
        %v688 = vshrl.u32 %v687, 7
        %v689 = vsub.s32 4, %v688
        %v690 = vrot.slane %v440, %v689
        %v691 = vadd.f32 %v685, %v690
        %v692 = vand.u32 2147483647, %v691
        %v693 = vstv %s610
        %v694 = vmul.f32 %v693, %v692
        %695 = vset.pattern.permute.xlu0 5
        %696 = vperm.xlu0 %695, %v435
        %v697 = vpop.permute.xlu0 %696
        %v699 = vlaneseq
        %v700 = vshrl.u32 %v699, 7
        %v701 = vsub.s32 5, %v700
        %v702 = vrot.slane %v440, %v701
        %v703 = vadd.f32 %v697, %v702
        %v704 = vand.u32 2147483647, %v703
        %v705 = vstv %s612
        %v706 = vmul.f32 %v705, %v704
        %v707 = vadd.f32 %v694, %v706
        %708 = vset.pattern.permute.xlu0 6
        %709 = vperm.xlu0 %708, %v435
        %v710 = vpop.permute.xlu0 %709
        %v712 = vlaneseq
        %v713 = vshrl.u32 %v712, 7
        %v714 = vsub.s32 6, %v713
        %v715 = vrot.slane %v440, %v714
        %v716 = vadd.f32 %v710, %v715
        %v717 = vand.u32 2147483647, %v716
        %v718 = vstv %s614
        %v719 = vmul.f32 %v718, %v717
        %v720 = vadd.f32 %v707, %v719
        %721 = vset.pattern.permute.xlu0 7
        %722 = vperm.xlu0 %721, %v435
        %v723 = vpop.permute.xlu0 %722
        %v725 = vlaneseq
        %v726 = vshrl.u32 %v725, 7
        %v727 = vsub.s32 7, %v726
        %v728 = vrot.slane %v440, %v727
        %v729 = vadd.f32 %v723, %v728
        %v730 = vand.u32 2147483647, %v729
        %v731 = vstv %s616
        %v732 = vmul.f32 %v731, %v730
        %v733 = vadd.f32 %v720, %v732
        %v734 = vadd.f32 %v682, %v733
        %vm735 = vcmask 64512
        %v736 = vsel %vm735, %v734, -inf
        %737 = vmax.xlane.f32.xlu0 %v736
        %v738 = vpop.xlane.xlu0 %737
        %v739 = vmax.f32 %v617, %v738
        %v740 = vsub.f32 %v617, %v739
        %v741 = vmul.f32 %v740, 1.442695
        %v742 = vpow.pop %v741
        %744 = vset.pattern.permute.xlu0 0
        %745 = vperm.xlu0 %744, %v739
        %v746 = vpop.permute.xlu0 %745
        %v748 = vsub.f32 %v734, %v746
        %v749 = vmul.f32 %v748, 1.442695
        %v750 = vpow.pop %v749
        %v751 = vmul.f32 %v742, %v618
        %v752 = vsel %vm735, %v750, 0.0
        %753 = vadd.xlane.f32.xlu0 %v752
        %v754 = vpop.xlane.xlu0 %753
        %v755 = vadd.f32 %v751, %v754
        %v756 = vpack.c.bf16 %v750, %v750
        %v758 = vsel %vm735, %v756, 0
        %vm760 = vcmask 1043456
        %v762 = vsel %vm760, %v444, 0
        %764 = vmatprep.subr.bf16.mxu0 0
        %765 = vmatpush1.bf16.msra.mxu0 0
        %766 = vmatprep.subr.bf16.mxu0 0
        %767 = vmatpush1.bf16.msra.mxu0 0
        %768 = vmatprep.subr.bf16.mxu0 0
        %769 = vmatpush1.bf16.msra.mxu0 0
        %770 = vmatprep.subr.bf16.mxu0 0
        %771 = vmatpush1.bf16.msra.mxu0 0
        %772 = vmatprep.subr.bf16.mxu0 0
        %773 = vmatpush1.bf16.msra.mxu0 0
        %774 = vmatprep.subr.bf16.mxu0 0
        %775 = vmatpush1.bf16.msra.mxu0 0
        %776 = vmatprep.subr.bf16.mxu0 0
        %777 = vmatpush1.bf16.msra.mxu0 0
        %778 = vmatprep.subr.bf16.mxu0 0
        %779 = vmatpush1.bf16.msra.mxu0 %v762
        %780 = vmatprep.subr.bf16.mxu0 0
        %781 = vmatpush2.bf16.msra.mxu0 0
        %782 = vmatprep.subr.bf16.mxu0 0
        %783 = vmatpush2.bf16.msra.mxu0 0
        %784 = vmatprep.subr.bf16.mxu0 0
        %785 = vmatpush2.bf16.msra.mxu0 0
        %786 = vmatprep.subr.bf16.mxu0 0
        %787 = vmatpush2.bf16.msra.mxu0 0
        %788 = vmatprep.subr.bf16.mxu0 0
        %789 = vmatpush2.bf16.msra.mxu0 0
        %790 = vmatprep.subr.bf16.mxu0 0
        %791 = vmatpush2.bf16.msra.mxu0 0
        %792 = vmatprep.subr.bf16.mxu0 0
        %793 = vmatpush2.bf16.msra.mxu0 0
        %794 = vmatprep.subr.bf16.mxu0 0
        %795 = vmatpush2.bf16.msra.mxu0 0
        %796 = vmatprep.mubr.bf16.mxu0 0
        %797 = vmatmul.mubr.bf16.gmra.mxu0 %v758
        %v798 = vpop.f32.mrf.mxu0
        %v799 = vadd.f32 0.0, %v798
        %v800 = vpop.f32.mrf.mxu0
        %v801 = vpop.f32.mrf.mxu0
        %v802 = vpop.f32.mrf.mxu0
        %803 = vdwg.mxu0
        %804 = vset.pattern.permute.xlu0 1
        %805 = vperm.xlu0 %804, %v524
        %v806 = vpop.permute.xlu0 %805
        %v808 = vlaneseq
        %v809 = vshrl.u32 %v808, 7
        %v810 = vsub.s32 1, %v809
        %v811 = vrot.slane %v598, %v810
        %v812 = vadd.f32 %v806, %v811
        %v813 = vmul.f32 %v812, 0.55
        %v814 = vadd.f32 %v448, %v813
        %815 = vset.pattern.permute.xlu0 8
        %816 = vperm.xlu0 %815, %v435
        %v817 = vpop.permute.xlu0 %816
        %v819 = vlaneseq
        %v820 = vshrl.u32 %v819, 7
        %v821 = vsub.s32 0, %v820
        %v822 = vrot.slane %v441, %v821
        %v823 = vadd.f32 %v817, %v822
        %v824 = vand.u32 2147483647, %v823
        %v825 = vmul.f32 %v641, %v824
        %826 = vset.pattern.permute.xlu0 9
        %827 = vperm.xlu0 %826, %v435
        %v828 = vpop.permute.xlu0 %827
        %v830 = vlaneseq
        %v831 = vshrl.u32 %v830, 7
        %v832 = vsub.s32 1, %v831
        %v833 = vrot.slane %v441, %v832
        %v834 = vadd.f32 %v828, %v833
        %v835 = vand.u32 2147483647, %v834
        %v836 = vmul.f32 %v653, %v835
        %v837 = vadd.f32 %v825, %v836
        %838 = vset.pattern.permute.xlu0 10
        %839 = vperm.xlu0 %838, %v435
        %v840 = vpop.permute.xlu0 %839
        %v842 = vlaneseq
        %v843 = vshrl.u32 %v842, 7
        %v844 = vsub.s32 2, %v843
        %v845 = vrot.slane %v441, %v844
        %v846 = vadd.f32 %v840, %v845
        %v847 = vand.u32 2147483647, %v846
        %v848 = vmul.f32 %v666, %v847
        %v849 = vadd.f32 %v837, %v848
        %850 = vset.pattern.permute.xlu0 11
        %851 = vperm.xlu0 %850, %v435
        %v852 = vpop.permute.xlu0 %851
        %v854 = vlaneseq
        %v855 = vshrl.u32 %v854, 7
        %v856 = vsub.s32 3, %v855
        %v857 = vrot.slane %v441, %v856
        %v858 = vadd.f32 %v852, %v857
        %v859 = vand.u32 2147483647, %v858
        %v860 = vmul.f32 %v679, %v859
        %v861 = vadd.f32 %v849, %v860
        %v862 = vadd.f32 %v814, %v861
        %863 = vset.pattern.permute.xlu0 12
        %864 = vperm.xlu0 %863, %v435
        %v865 = vpop.permute.xlu0 %864
        %v867 = vlaneseq
        %v868 = vshrl.u32 %v867, 7
        %v869 = vsub.s32 4, %v868
        %v870 = vrot.slane %v441, %v869
        %v871 = vadd.f32 %v865, %v870
        %v872 = vand.u32 2147483647, %v871
        %v873 = vmul.f32 %v693, %v872
        %874 = vset.pattern.permute.xlu0 13
        %875 = vperm.xlu0 %874, %v435
        %v876 = vpop.permute.xlu0 %875
        %v878 = vlaneseq
        %v879 = vshrl.u32 %v878, 7
        %v880 = vsub.s32 5, %v879
        %v881 = vrot.slane %v441, %v880
        %v882 = vadd.f32 %v876, %v881
        %v883 = vand.u32 2147483647, %v882
        %v884 = vmul.f32 %v705, %v883
        %v885 = vadd.f32 %v873, %v884
        %886 = vset.pattern.permute.xlu0 14
        %887 = vperm.xlu0 %886, %v435
        %v888 = vpop.permute.xlu0 %887
        %v890 = vlaneseq
        %v891 = vshrl.u32 %v890, 7
        %v892 = vsub.s32 6, %v891
        %v893 = vrot.slane %v441, %v892
        %v894 = vadd.f32 %v888, %v893
        %v895 = vand.u32 2147483647, %v894
        %v896 = vmul.f32 %v718, %v895
        %v897 = vadd.f32 %v885, %v896
        %898 = vset.pattern.permute.xlu0 15
        %899 = vperm.xlu0 %898, %v435
        %v900 = vpop.permute.xlu0 %899
        %v902 = vlaneseq
        %v903 = vshrl.u32 %v902, 7
        %v904 = vsub.s32 7, %v903
        %v905 = vrot.slane %v441, %v904
        %v906 = vadd.f32 %v900, %v905
        %v907 = vand.u32 2147483647, %v906
        %v908 = vmul.f32 %v731, %v907
        %v909 = vadd.f32 %v897, %v908
        %v910 = vadd.f32 %v862, %v909
        %v911 = vsel %vm735, %v910, -inf
        %912 = vmax.xlane.f32.xlu0 %v911
        %v913 = vpop.xlane.xlu0 %912
        %v914 = vmax.f32 %v617, %v913
        %v915 = vsub.f32 %v617, %v914
        %v916 = vmul.f32 %v915, 1.442695
        %v917 = vpow.pop %v916
        %919 = vset.pattern.permute.xlu0 1
        %920 = vperm.xlu0 %919, %v914
        %v921 = vpop.permute.xlu0 %920
        %v923 = vsub.f32 %v910, %v921
        %v924 = vmul.f32 %v923, 1.442695
        %v925 = vpow.pop %v924
        %v926 = vmul.f32 %v917, %v618
        %v927 = vsel %vm735, %v925, 0.0
        %928 = vadd.xlane.f32.xlu0 %v927
        %v929 = vpop.xlane.xlu0 %928
        %v930 = vadd.f32 %v926, %v929
        %v931 = vpack.c.bf16 %v925, %v925
        %v933 = vunpack.c.l.b16 %v444
        %v934 = vpack.c.b16 %v933, %v933
        %935 = vrot.lane.b32.xlu0 %v934, 120
        %v936 = vpop.permute.xlu0 %935
        %v938 = vsel %vm735, %v931, 0
        %v941 = vsel %vm760, %v936, 0
        %943 = vmatprep.subr.bf16.mxu0 0
        %944 = vmatpush1.bf16.msra.mxu0 0
        %945 = vmatprep.subr.bf16.mxu0 0
        %946 = vmatpush1.bf16.msra.mxu0 0
        %947 = vmatprep.subr.bf16.mxu0 0
        %948 = vmatpush1.bf16.msra.mxu0 0
        %949 = vmatprep.subr.bf16.mxu0 0
        %950 = vmatpush1.bf16.msra.mxu0 0
        %951 = vmatprep.subr.bf16.mxu0 0
        %952 = vmatpush1.bf16.msra.mxu0 0
        %953 = vmatprep.subr.bf16.mxu0 0
        %954 = vmatpush1.bf16.msra.mxu0 0
        %955 = vmatprep.subr.bf16.mxu0 0
        %956 = vmatpush1.bf16.msra.mxu0 0
        %957 = vmatprep.subr.bf16.mxu0 0
        %958 = vmatpush1.bf16.msra.mxu0 %v941
        %959 = vmatprep.subr.bf16.mxu0 0
        %960 = vmatpush2.bf16.msra.mxu0 0
        %961 = vmatprep.subr.bf16.mxu0 0
        %962 = vmatpush2.bf16.msra.mxu0 0
        %963 = vmatprep.subr.bf16.mxu0 0
        %964 = vmatpush2.bf16.msra.mxu0 0
        %965 = vmatprep.subr.bf16.mxu0 0
        %966 = vmatpush2.bf16.msra.mxu0 0
        %967 = vmatprep.subr.bf16.mxu0 0
        %968 = vmatpush2.bf16.msra.mxu0 0
        %969 = vmatprep.subr.bf16.mxu0 0
        %970 = vmatpush2.bf16.msra.mxu0 0
        %971 = vmatprep.subr.bf16.mxu0 0
        %972 = vmatpush2.bf16.msra.mxu0 0
        %973 = vmatprep.subr.bf16.mxu0 0
        %974 = vmatpush2.bf16.msra.mxu0 0
        %975 = vmatprep.mubr.bf16.mxu0 0
        %976 = vmatmul.mubr.bf16.gmra.mxu0 %v938
        %v977 = vpop.f32.mrf.mxu0
        %v978 = vadd.f32 0.0, %v977
        %v979 = vpop.f32.mrf.mxu0
        %v980 = vpop.f32.mrf.mxu0
        %v981 = vpop.f32.mrf.mxu0
        %982 = vdwg.mxu0
        %983 = vset.pattern.permute.xlu0 2
        %984 = vperm.xlu0 %983, %v524
        %v985 = vpop.permute.xlu0 %984
        %v987 = vlaneseq
        %v988 = vshrl.u32 %v987, 7
        %v989 = vsub.s32 2, %v988
        %v990 = vrot.slane %v598, %v989
        %v991 = vadd.f32 %v985, %v990
        %v992 = vmul.f32 %v991, 0.55
        %v993 = vadd.f32 %v448, %v992
        %994 = vset.pattern.permute.xlu0 16
        %995 = vperm.xlu0 %994, %v435
        %v996 = vpop.permute.xlu0 %995
        %v998 = vlaneseq
        %v999 = vshrl.u32 %v998, 7
        %v1000 = vsub.s32 0, %v999
        %v1001 = vrot.slane %v442, %v1000
        %v1002 = vadd.f32 %v996, %v1001
        %v1003 = vand.u32 2147483647, %v1002
        %v1004 = vmul.f32 %v641, %v1003
        %1005 = vset.pattern.permute.xlu0 17
        %1006 = vperm.xlu0 %1005, %v435
        %v1007 = vpop.permute.xlu0 %1006
        %v1009 = vlaneseq
        %v1010 = vshrl.u32 %v1009, 7
        %v1011 = vsub.s32 1, %v1010
        %v1012 = vrot.slane %v442, %v1011
        %v1013 = vadd.f32 %v1007, %v1012
        %v1014 = vand.u32 2147483647, %v1013
        %v1015 = vmul.f32 %v653, %v1014
        %v1016 = vadd.f32 %v1004, %v1015
        %1017 = vset.pattern.permute.xlu0 18
        %1018 = vperm.xlu0 %1017, %v435
        %v1019 = vpop.permute.xlu0 %1018
        %v1021 = vlaneseq
        %v1022 = vshrl.u32 %v1021, 7
        %v1023 = vsub.s32 2, %v1022
        %v1024 = vrot.slane %v442, %v1023
        %v1025 = vadd.f32 %v1019, %v1024
        %v1026 = vand.u32 2147483647, %v1025
        %v1027 = vmul.f32 %v666, %v1026
        %v1028 = vadd.f32 %v1016, %v1027
        %1029 = vset.pattern.permute.xlu0 19
        %1030 = vperm.xlu0 %1029, %v435
        %v1031 = vpop.permute.xlu0 %1030
        %v1033 = vlaneseq
        %v1034 = vshrl.u32 %v1033, 7
        %v1035 = vsub.s32 3, %v1034
        %v1036 = vrot.slane %v442, %v1035
        %v1037 = vadd.f32 %v1031, %v1036
        %v1038 = vand.u32 2147483647, %v1037
        %v1039 = vmul.f32 %v679, %v1038
        %v1040 = vadd.f32 %v1028, %v1039
        %v1041 = vadd.f32 %v993, %v1040
        %1042 = vset.pattern.permute.xlu0 20
        %1043 = vperm.xlu0 %1042, %v435
        %v1044 = vpop.permute.xlu0 %1043
        %v1046 = vlaneseq
        %v1047 = vshrl.u32 %v1046, 7
        %v1048 = vsub.s32 4, %v1047
        %v1049 = vrot.slane %v442, %v1048
        %v1050 = vadd.f32 %v1044, %v1049
        %v1051 = vand.u32 2147483647, %v1050
        %v1052 = vmul.f32 %v693, %v1051
        %1053 = vset.pattern.permute.xlu0 21
        %1054 = vperm.xlu0 %1053, %v435
        %v1055 = vpop.permute.xlu0 %1054
        %v1057 = vlaneseq
        %v1058 = vshrl.u32 %v1057, 7
        %v1059 = vsub.s32 5, %v1058
        %v1060 = vrot.slane %v442, %v1059
        %v1061 = vadd.f32 %v1055, %v1060
        %v1062 = vand.u32 2147483647, %v1061
        %v1063 = vmul.f32 %v705, %v1062
        %v1064 = vadd.f32 %v1052, %v1063
        %1065 = vset.pattern.permute.xlu0 22
        %1066 = vperm.xlu0 %1065, %v435
        %v1067 = vpop.permute.xlu0 %1066
        %v1069 = vlaneseq
        %v1070 = vshrl.u32 %v1069, 7
        %v1071 = vsub.s32 6, %v1070
        %v1072 = vrot.slane %v442, %v1071
        %v1073 = vadd.f32 %v1067, %v1072
        %v1074 = vand.u32 2147483647, %v1073
        %v1075 = vmul.f32 %v718, %v1074
        %v1076 = vadd.f32 %v1064, %v1075
        %1077 = vset.pattern.permute.xlu0 23
        %1078 = vperm.xlu0 %1077, %v435
        %v1079 = vpop.permute.xlu0 %1078
        %v1081 = vlaneseq
        %v1082 = vshrl.u32 %v1081, 7
        %v1083 = vsub.s32 7, %v1082
        %v1084 = vrot.slane %v442, %v1083
        %v1085 = vadd.f32 %v1079, %v1084
        %v1086 = vand.u32 2147483647, %v1085
        %v1087 = vmul.f32 %v731, %v1086
        %v1088 = vadd.f32 %v1076, %v1087
        %v1089 = vadd.f32 %v1041, %v1088
        %v1090 = vsel %vm735, %v1089, -inf
        %1091 = vmax.xlane.f32.xlu0 %v1090
        %v1092 = vpop.xlane.xlu0 %1091
        %v1093 = vmax.f32 %v617, %v1092
        %v1094 = vsub.f32 %v617, %v1093
        %v1095 = vmul.f32 %v1094, 1.442695
        %v1096 = vpow.pop %v1095
        %1098 = vset.pattern.permute.xlu0 2
        %1099 = vperm.xlu0 %1098, %v1093
        %v1100 = vpop.permute.xlu0 %1099
        %v1102 = vsub.f32 %v1089, %v1100
        %v1103 = vmul.f32 %v1102, 1.442695
        %v1104 = vpow.pop %v1103
        %v1105 = vmul.f32 %v1096, %v618
        %v1106 = vsel %vm735, %v1104, 0.0
        %1107 = vadd.xlane.f32.xlu0 %v1106
        %v1108 = vpop.xlane.xlu0 %1107
        %v1109 = vadd.f32 %v1105, %v1108
        %v1110 = vpack.c.bf16 %v1104, %v1104
        %1111 = vrot.lane.b32.xlu0 %v934, 112
        %v1112 = vpop.permute.xlu0 %1111
        %v1114 = vsel %vm735, %v1110, 0
        %v1117 = vsel %vm760, %v1112, 0
        %1119 = vmatprep.subr.bf16.mxu0 0
        %1120 = vmatpush1.bf16.msra.mxu0 0
        %1121 = vmatprep.subr.bf16.mxu0 0
        %1122 = vmatpush1.bf16.msra.mxu0 0
        %1123 = vmatprep.subr.bf16.mxu0 0
        %1124 = vmatpush1.bf16.msra.mxu0 0
        %1125 = vmatprep.subr.bf16.mxu0 0
        %1126 = vmatpush1.bf16.msra.mxu0 0
        %1127 = vmatprep.subr.bf16.mxu0 0
        %1128 = vmatpush1.bf16.msra.mxu0 0
        %1129 = vmatprep.subr.bf16.mxu0 0
        %1130 = vmatpush1.bf16.msra.mxu0 0
        %1131 = vmatprep.subr.bf16.mxu0 0
        %1132 = vmatpush1.bf16.msra.mxu0 0
        %1133 = vmatprep.subr.bf16.mxu0 0
        %1134 = vmatpush1.bf16.msra.mxu0 %v1117
        %1135 = vmatprep.subr.bf16.mxu0 0
        %1136 = vmatpush2.bf16.msra.mxu0 0
        %1137 = vmatprep.subr.bf16.mxu0 0
        %1138 = vmatpush2.bf16.msra.mxu0 0
        %1139 = vmatprep.subr.bf16.mxu0 0
        %1140 = vmatpush2.bf16.msra.mxu0 0
        %1141 = vmatprep.subr.bf16.mxu0 0
        %1142 = vmatpush2.bf16.msra.mxu0 0
        %1143 = vmatprep.subr.bf16.mxu0 0
        %1144 = vmatpush2.bf16.msra.mxu0 0
        %1145 = vmatprep.subr.bf16.mxu0 0
        %1146 = vmatpush2.bf16.msra.mxu0 0
        %1147 = vmatprep.subr.bf16.mxu0 0
        %1148 = vmatpush2.bf16.msra.mxu0 0
        %1149 = vmatprep.subr.bf16.mxu0 0
        %1150 = vmatpush2.bf16.msra.mxu0 0
        %1151 = vmatprep.mubr.bf16.mxu0 0
        %1152 = vmatmul.mubr.bf16.gmra.mxu0 %v1114
        %v1153 = vpop.f32.mrf.mxu0
        %v1154 = vadd.f32 0.0, %v1153
        %v1155 = vpop.f32.mrf.mxu0
        %v1156 = vpop.f32.mrf.mxu0
        %v1157 = vpop.f32.mrf.mxu0
        %1158 = vdwg.mxu0
        %1159 = vset.pattern.permute.xlu0 3
        %1160 = vperm.xlu0 %1159, %v524
        %v1161 = vpop.permute.xlu0 %1160
        %v1163 = vlaneseq
        %v1164 = vshrl.u32 %v1163, 7
        %v1165 = vsub.s32 3, %v1164
        %v1166 = vrot.slane %v598, %v1165
        %v1167 = vadd.f32 %v1161, %v1166
        %v1168 = vmul.f32 %v1167, 0.55
        %v1169 = vadd.f32 %v448, %v1168
        %1170 = vset.pattern.permute.xlu0 24
        %1171 = vperm.xlu0 %1170, %v435
        %v1172 = vpop.permute.xlu0 %1171
        %v1174 = vlaneseq
        %v1175 = vshrl.u32 %v1174, 7
        %v1176 = vsub.s32 0, %v1175
        %v1177 = vrot.slane %v443, %v1176
        %v1178 = vadd.f32 %v1172, %v1177
        %v1179 = vand.u32 2147483647, %v1178
        %v1180 = vmul.f32 %v641, %v1179
        %1181 = vset.pattern.permute.xlu0 25
        %1182 = vperm.xlu0 %1181, %v435
        %v1183 = vpop.permute.xlu0 %1182
        %v1185 = vlaneseq
        %v1186 = vshrl.u32 %v1185, 7
        %v1187 = vsub.s32 1, %v1186
        %v1188 = vrot.slane %v443, %v1187
        %v1189 = vadd.f32 %v1183, %v1188
        %v1190 = vand.u32 2147483647, %v1189
        %v1191 = vmul.f32 %v653, %v1190
        %v1192 = vadd.f32 %v1180, %v1191
        %1193 = vset.pattern.permute.xlu0 26
        %1194 = vperm.xlu0 %1193, %v435
        %v1195 = vpop.permute.xlu0 %1194
        %v1197 = vlaneseq
        %v1198 = vshrl.u32 %v1197, 7
        %v1199 = vsub.s32 2, %v1198
        %v1200 = vrot.slane %v443, %v1199
        %v1201 = vadd.f32 %v1195, %v1200
        %v1202 = vand.u32 2147483647, %v1201
        %v1203 = vmul.f32 %v666, %v1202
        %v1204 = vadd.f32 %v1192, %v1203
        %1205 = vset.pattern.permute.xlu0 27
        %1206 = vperm.xlu0 %1205, %v435
        %v1207 = vpop.permute.xlu0 %1206
        %v1209 = vlaneseq
        %v1210 = vshrl.u32 %v1209, 7
        %v1211 = vsub.s32 3, %v1210
        %v1212 = vrot.slane %v443, %v1211
        %v1213 = vadd.f32 %v1207, %v1212
        %v1214 = vand.u32 2147483647, %v1213
        %v1215 = vmul.f32 %v679, %v1214
        %v1216 = vadd.f32 %v1204, %v1215
        %v1217 = vadd.f32 %v1169, %v1216
        %1218 = vset.pattern.permute.xlu0 28
        %1219 = vperm.xlu0 %1218, %v435
        %v1220 = vpop.permute.xlu0 %1219
        %v1222 = vlaneseq
        %v1223 = vshrl.u32 %v1222, 7
        %v1224 = vsub.s32 4, %v1223
        %v1225 = vrot.slane %v443, %v1224
        %v1226 = vadd.f32 %v1220, %v1225
        %v1227 = vand.u32 2147483647, %v1226
        %v1228 = vmul.f32 %v693, %v1227
        %1229 = vset.pattern.permute.xlu0 29
        %1230 = vperm.xlu0 %1229, %v435
        %v1231 = vpop.permute.xlu0 %1230
        %v1233 = vlaneseq
        %v1234 = vshrl.u32 %v1233, 7
        %v1235 = vsub.s32 5, %v1234
        %v1236 = vrot.slane %v443, %v1235
        %v1237 = vadd.f32 %v1231, %v1236
        %v1238 = vand.u32 2147483647, %v1237
        %v1239 = vmul.f32 %v705, %v1238
        %v1240 = vadd.f32 %v1228, %v1239
        %1241 = vset.pattern.permute.xlu0 30
        %1242 = vperm.xlu0 %1241, %v435
        %v1243 = vpop.permute.xlu0 %1242
        %v1245 = vlaneseq
        %v1246 = vshrl.u32 %v1245, 7
        %v1247 = vsub.s32 6, %v1246
        %v1248 = vrot.slane %v443, %v1247
        %v1249 = vadd.f32 %v1243, %v1248
        %v1250 = vand.u32 2147483647, %v1249
        %v1251 = vmul.f32 %v718, %v1250
        %v1252 = vadd.f32 %v1240, %v1251
        %1253 = vset.pattern.permute.xlu0 31
        %1254 = vperm.xlu0 %1253, %v435
        %v1255 = vpop.permute.xlu0 %1254
        %v1257 = vlaneseq
        %v1258 = vshrl.u32 %v1257, 7
        %v1259 = vsub.s32 7, %v1258
        %v1260 = vrot.slane %v443, %v1259
        %v1261 = vadd.f32 %v1255, %v1260
        %v1262 = vand.u32 2147483647, %v1261
        %v1263 = vmul.f32 %v731, %v1262
        %v1264 = vadd.f32 %v1252, %v1263
        %v1265 = vadd.f32 %v1217, %v1264
        %v1266 = vsel %vm735, %v1265, -inf
        %1267 = vmax.xlane.f32.xlu0 %v1266
        %v1268 = vpop.xlane.xlu0 %1267
        %v1269 = vmax.f32 %v617, %v1268
        %v1270 = vsub.f32 %v617, %v1269
        %v1271 = vmul.f32 %v1270, 1.442695
        %v1272 = vpow.pop %v1271
        %1274 = vset.pattern.permute.xlu0 3
        %1275 = vperm.xlu0 %1274, %v1269
        %v1276 = vpop.permute.xlu0 %1275
        %v1278 = vsub.f32 %v1265, %v1276
        %v1279 = vmul.f32 %v1278, 1.442695
        %v1280 = vpow.pop %v1279
        %v1281 = vmul.f32 %v1272, %v618
        %v1282 = vsel %vm735, %v1280, 0.0
        %1283 = vadd.xlane.f32.xlu0 %v1282
        %v1284 = vpop.xlane.xlu0 %1283
        %v1285 = vadd.f32 %v1281, %v1284
        %v1286 = vpack.c.bf16 %v1280, %v1280
        %1287 = vrot.lane.b32.xlu0 %v934, 104
        %v1288 = vpop.permute.xlu0 %1287
        %v1290 = vsel %vm735, %v1286, 0
        %v1293 = vsel %vm760, %v1288, 0
        %1295 = vmatprep.subr.bf16.mxu0 0
        %1296 = vmatpush1.bf16.msra.mxu0 0
        %1297 = vmatprep.subr.bf16.mxu0 0
        %1298 = vmatpush1.bf16.msra.mxu0 0
        %1299 = vmatprep.subr.bf16.mxu0 0
        %1300 = vmatpush1.bf16.msra.mxu0 0
        %1301 = vmatprep.subr.bf16.mxu0 0
        %1302 = vmatpush1.bf16.msra.mxu0 0
        %1303 = vmatprep.subr.bf16.mxu0 0
        %1304 = vmatpush1.bf16.msra.mxu0 0
        %1305 = vmatprep.subr.bf16.mxu0 0
        %1306 = vmatpush1.bf16.msra.mxu0 0
        %1307 = vmatprep.subr.bf16.mxu0 0
        %1308 = vmatpush1.bf16.msra.mxu0 0
        %1309 = vmatprep.subr.bf16.mxu0 0
        %1310 = vmatpush1.bf16.msra.mxu0 %v1293
        %1311 = vmatprep.subr.bf16.mxu0 0
        %1312 = vmatpush2.bf16.msra.mxu0 0
        %1313 = vmatprep.subr.bf16.mxu0 0
        %1314 = vmatpush2.bf16.msra.mxu0 0
        %1315 = vmatprep.subr.bf16.mxu0 0
        %1316 = vmatpush2.bf16.msra.mxu0 0
        %1317 = vmatprep.subr.bf16.mxu0 0
        %1318 = vmatpush2.bf16.msra.mxu0 0
        %1319 = vmatprep.subr.bf16.mxu0 0
        %1320 = vmatpush2.bf16.msra.mxu0 0
        %1321 = vmatprep.subr.bf16.mxu0 0
        %1322 = vmatpush2.bf16.msra.mxu0 0
        %1323 = vmatprep.subr.bf16.mxu0 0
        %1324 = vmatpush2.bf16.msra.mxu0 0
        %1325 = vmatprep.subr.bf16.mxu0 0
        %1326 = vmatpush2.bf16.msra.mxu0 0
        %1327 = vmatprep.mubr.bf16.mxu0 0
        %1328 = vmatmul.mubr.bf16.gmra.mxu0 %v1290
        %v1329 = vpop.f32.mrf.mxu0
        %v1330 = vadd.f32 0.0, %v1329
        %v1331 = vpop.f32.mrf.mxu0
        %v1332 = vpop.f32.mrf.mxu0
        %v1333 = vpop.f32.mrf.mxu0
        %1334 = vdwg.mxu0
        %vm1335 = vcmask 7168
        %v1336 = vsel %vm1335, %v739, %v914
        %vm1337 = vcmask 15360
        %v1338 = vsel %vm1337, %v1336, %v1093
        %vm1339 = vcmask 23552
        %v1340 = vsel %vm1339, %v1338, %v1269
        %vm1341 = vcmask 31744
        %1342 = vst.msk [vmem:[#allocation3] sm:$0xff] %vm1341, %v1340
        %v1343 = vsel %vm1335, %v755, %v930
        %v1344 = vsel %vm1337, %v1343, %v1109
        %v1345 = vsel %vm1339, %v1344, %v1285
        %1346 = vst.msk [vmem:[#allocation4] sm:$0xff] %vm1341, %v1345
        %1348 = vset.pattern.permute.xlu0 0
        %1349 = vperm.xlu0 %1348, %v742
        %v1350 = vpop.permute.xlu0 %1349
        %1353 = vset.pattern.permute.xlu0 1
        %1354 = vperm.xlu0 %1353, %v917
        %v1355 = vpop.permute.xlu0 %1354
        %1358 = vset.pattern.permute.xlu0 2
        %1359 = vperm.xlu0 %1358, %v1096
        %v1360 = vpop.permute.xlu0 %1359
        %1363 = vset.pattern.permute.xlu0 3
        %1364 = vperm.xlu0 %1363, %v1272
        %v1365 = vpop.permute.xlu0 %1364
        %v1367 = vsel %vm735, %v1350, %v1355
        %vm1368 = vcmask 130048
        %v1369 = vsel %vm1368, %v1367, %v1360
        %vm1370 = vcmask 195584
        %v1371 = vsel %vm1370, %v1369, %v1365
        %1373 = vrot.lane.b32.xlu0 %v978, 8
        %v1374 = vpop.permute.xlu0 %1373
        %1377 = vrot.lane.b32.xlu0 %v1154, 16
        %v1378 = vpop.permute.xlu0 %1377
        %1381 = vrot.lane.b32.xlu0 %v1330, 24
        %v1382 = vpop.permute.xlu0 %1381
        %v1384 = vsel %vm735, %v799, %v1374
        %v1385 = vsel %vm1368, %v1384, %v1378
        %v1386 = vsel %vm1370, %v1385, %v1382
        %v1387 = vld [vmem:[#allocation2] sm:$0xff]
        %v1388 = vmul.f32 %v1371, %v1387
        %v1389 = vadd.f32 %v1388, %v1386
        %1390 = vst.msk [vmem:[#allocation2] sm:$0xff] %vm453, %v1389
        // Predicated region
        $region57: #{gatv3_forward.4} parent=47 // pred_check
          %p1391 = pneg %p425
        $region58: #{gatv3_forward.4} parent=47 // pred_check_branch
          %1393 = sbr.rel (%p1391) target = $region60
        $region59: #{gatv3_forward.4} parent=47 // pred_region
          %v1394 = vld [vmem:[#allocation4] sm:$0xff]
          %v1395 = vrcp.pop %v1394
          %1397 = vset.pattern.permute.xlu0 0
          %1398 = vperm.xlu0 %1397, %v1395
          %v1399 = vpop.permute.xlu0 %1398
          %1401 = vset.pattern.permute.xlu0 1
          %1402 = vperm.xlu0 %1401, %v1395
          %v1403 = vpop.permute.xlu0 %1402
          %1405 = vset.pattern.permute.xlu0 2
          %1406 = vperm.xlu0 %1405, %v1395
          %v1407 = vpop.permute.xlu0 %1406
          %1409 = vset.pattern.permute.xlu0 3
          %1410 = vperm.xlu0 %1409, %v1395
          %v1411 = vpop.permute.xlu0 %1410
          %v1413 = vsel %vm735, %v1399, %v1403
          %v1414 = vsel %vm1368, %v1413, %v1407
          %v1415 = vsel %vm1370, %v1414, %v1411
          %v1416 = vld [vmem:[#allocation2] sm:$0xff]
          %v1417 = vmul.f32 %v1416, %v1415
          %v1418 = vpack.c.bf16 %v1417, %v1417
          %vm1419 = vcmask 257024
          %1420 = vst.msk [vmem:[%s423] sm:$0xf] %vm1419, %v1418
        $region60: #{gatv3_forward.4} parent=47 // pred_fallthru
          _
        %p1421 = scmp.lt.s32.totalorder %s24, 1
        %s1422 = scalar_select %p1421, %s24, 1
        %p1423 = scmp.lt.s32.totalorder %s25, 0
        %s1424 = scalar_select %p1423, %s25, 0
        %s1425 = sadd.s32 %s1424, %s1422
        %s1426 = smul.addr %s1425, 4
        %s1427 = scalar_lea.vmem %s7, %s1426
        // Predicated region
        $region61: #{gatv3_forward.4} parent=47 // pred_check
          %p1428 = pneg %p235
        $region62: #{gatv3_forward.4} parent=47 // pred_check_branch
          %1430 = sbr.rel (%p1428) target = $region64
        $region63: #{gatv3_forward.4} parent=47 // pred_region
          _
        $region64: #{gatv3_forward.4} parent=47 // pred_fallthru
          _
      $region48: #{gatv3_forward.4} parent=5 // pred_fallthru
        _
      %p1431 = scmp.le.s32.totalorder 2, %s14
      // Predicated region
      $region65: #{gatv3_forward.4} parent=5 // pred_check
        %p1432 = pneg %p1431
      $region66: #{gatv3_forward.4} parent=5 // pred_check_branch
        %1434 = sbr.rel (%p1432) target = $region68
      $region67: #{gatv3_forward.4} parent=5 // pred_region
        %s1435 = ssub.s32 %s14, 2
        // Predicated region
        $region69: #{gatv3_forward.4} parent=67 // pred_check
          %p1436 = pneg %p241
        $region70: #{gatv3_forward.4} parent=67 // pred_check_branch
          %1438 = sbr.rel (%p1436) target = $region72
        $region71: #{gatv3_forward.4} parent=67 // pred_region
          %p1439 = scmp.lt.s32.totalorder %s27, 1
          %s1440 = scalar_select %p1439, %s27, 1
          %p1441 = scmp.lt.s32.totalorder %s28, 0
          %s1442 = scalar_select %p1441, %s28, 0
          %s1443 = sadd.s32 %s1442, %s1440
          %s1444 = smul.addr %s1443, 4
          %s1445 = scalar_lea.vmem %s7, %s1444
        $region72: #{gatv3_forward.4} parent=67 // pred_fallthru
          _
      $region68: #{gatv3_forward.4} parent=5 // pred_fallthru
        _
    $region6: #{gatv3_forward.4} parent=1 // loop_footer
      %s18 = sadd.s32 1, %s14
    $region7: #{gatv3_forward.4} parent=1 // loop_footer_branch
      %13 = sbr.rel target = $region3
    $region8: #{gatv3_forward.4} parent=1 // loop_exit
      _
    %1446 = vsyncpa [#allocation6], 1
    %s1447 = scalar_lea.sflag [#allocation6], 1
    %1448 = vsyncpa %s1447, 1

</llo_original>
